<compile_context>
chip_gen: v6e
topology: v6e:2x2x1
jax: 0.10.0
libtpu: 0.0.40
codegen_flags: <defaults>
</compile_context>

<pallas_src>
import jax
import jax.numpy as jnp
from jax import lax
from jax.experimental import pallas as pl
from jax.experimental.pallas import tpu as pltpu


def _spd_oct_conv_kernel(xm_ref, xh0_ref, xh1_ref, w_ref, b_ref, o_ref, pa_ref, pb_ref):
    """Merged OctConv 3x3 'same' conv on one row band of one image.

    xm_ref  : (1, TH, W2+2, Cin)   bf16  padded-input rows [r*TH, (r+1)*TH)
    xh{0,1} : (1, 1,  W2+2, Cin)   bf16  the two halo rows just below the band
    w_ref   : (9*Cin, Cout_p)      bf16  merged weight, (ky, kx, cin) flattened into K
    b_ref   : (1, Cout_p)          f32   merged bias (zero-padded to Cout_p)
    o_ref   : (1, TH, W2, Cout_p)  bf16  output band (lane-dense: Cout_p % 128 == 0)
    pa/pb   : (TH, W2, 3*Cin)      bf16  VMEM im2col panel for one ky group (alternated)
    """
    th, w2, cout_p = o_ref.shape[1], o_ref.shape[2], o_ref.shape[3]
    cin = xm_ref.shape[3]
    m = th * w2
    gk = 3 * cin
    halos = (xh0_ref, xh1_ref)
    # Alternate panels so building group ky+1 is independent of the dot reading group ky.
    panels = (pa_ref, pb_ref, pa_ref)

    acc = None
    for ky in range(3):                       # static 3x3 tap loops, unrolled at trace time
        panel = panels[ky]
        for kx in range(3):
            c0 = kx * cin
            # Band rows ky..ky+TH-1: rows < TH come from the main block, the rest from the
            # halo rows.  All slices are static.  (Masked stores when Cin % 128 != 0.)
            n_main = max(0, th - ky)
            if n_main > 0:
                panel[0:n_main, :, c0:c0 + cin] = xm_ref[0, ky:ky + n_main, kx:kx + w2, :]
            for j in range(ky):
                pr = th - ky + j              # panel row receiving halo row j
                if pr >= 0:
                    panel[pr, :, c0:c0 + cin] = halos[j][0, 0, kx:kx + w2, :]
        # One accumulating MXU dot per ky group (K = 3*Cin).
        part = jnp.dot(panel[...].reshape(m, gk), w_ref[ky * gk:(ky + 1) * gk, :],
                       preferred_element_type=jnp.float32)
        acc = part if acc is None else acc + part

    out = acc + b_ref[...]                    # f32 bias add on the f32 accumulator
    o_ref[0] = out.reshape(th, w2, cout_p).astype(o_ref.dtype)


def _vmem_limit_bytes():
    """Generation-aware scoped-VMEM limit (~3/4 of physical, capped)."""
    try:
        phys = pltpu.get_tpu_info().vmem_capacity_bytes
    except Exception:
        phys = 64 * 1024 * 1024               # conservative default (v7x-sized)
    return int(min(phys * 3 // 4, 100 * 1024 * 1024))


def _select_tile_h(batch, h2, w2, cin, cout_p, vmem_limit):
    """Largest divisor of H2 whose per-block VMEM footprint fits the budget; prefer enough
    grid steps for both v7x TensorCores / pipeline depth as long as the matmul M stays big."""
    budget = int(vmem_limit * 0.7)            # headroom for compiler temps

    def block_bytes(th):
        m = th * w2
        x_band = 2 * (th + 2) * (w2 + 2) * cin * 2      # double-buffered bf16 input band
        wgt = 2 * (9 * cin * cout_p * 2 + cout_p * 4)   # default double-buffered weight+bias
        outb = 2 * m * cout_p * 2                       # double-buffered bf16 output band
        panels = 2 * m * 3 * cin * 2                    # two ky-group im2col panels (scratch)
        accs = 2 * m * cout_p * 4                       # f32 partial-sum temporaries
        return x_band + wgt + outb + panels + accs

    divisors = [th for th in range(1, h2 + 1) if h2 % th == 0]
    fitting = [th for th in divisors if block_bytes(th) <= budget] or [divisors[0]]
    # TODO(synk): cin*cout so large that even a 1-row band overflows would need a K/N split.
    preferred = [th for th in fitting if batch * (h2 // th) >= 8 and th * w2 >= 256]
    return max(preferred) if preferred else max(fitting)


def init_octconv_params(key, inc, ouc):
    """Deterministic OctConv params (PyTorch Conv2d-style uniform init), merged into one conv.

    Returns W: (3, 3, 4*inc, ouc) in (kh, kw, Cin, Cout) layout, bias: (ouc,).
    """
    cin = inc * 4
    a_in = int(0.5 * cin)
    a_out = int(0.5 * ouc)
    c_lf_in, c_hf_in = a_in, cin - a_in
    c_lf_out, c_hf_out = a_out, ouc - a_out

    def conv_init(k, cin_, cout_):
        kw_, kb_ = jax.random.split(k)
        bound = 1.0 / jnp.sqrt(jnp.float32(cin_ * 9))
        w = jax.random.uniform(kw_, (3, 3, cin_, cout_), jnp.float32, -bound, bound)
        bb = jax.random.uniform(kb_, (cout_,), jnp.float32, -bound, bound)
        return w, bb

    k1, k2, k3, k4 = jax.random.split(key, 4)
    w_l2l, b_l2l = conv_init(k1, c_lf_in, c_lf_out)
    w_l2h, b_l2h = conv_init(k2, c_lf_in, c_hf_out)
    w_h2l, b_h2l = conv_init(k3, c_hf_in, c_lf_out)
    w_h2h, b_h2h = conv_init(k4, c_hf_in, c_hf_out)

    # Input channel order is [hf ; lf]; output channel order is [hf_ ; lf_].
    W = jnp.zeros((3, 3, cin, ouc), jnp.float32)
    W = W.at[:, :, :c_hf_in, :c_hf_out].set(w_h2h)   # hf -> hf_
    W = W.at[:, :, c_hf_in:, :c_hf_out].set(w_l2h)   # lf -> hf_
    W = W.at[:, :, :c_hf_in, c_hf_out:].set(w_h2l)   # hf -> lf_
    W = W.at[:, :, c_hf_in:, c_hf_out:].set(w_l2l)   # lf -> lf_
    bias = jnp.concatenate([b_h2h + b_l2h, b_h2l + b_l2l])
    return W, bias


def spdconv_oct_forward(x_nchw, W, bias):
    """x: (B, C, H, W) f32 -> (B, Cout, H//2, W//2) f32 (NCHW, like the PyTorch module).

    bf16 activations/weights on the MXU with f32 accumulation and bf16 kernel writeback
    (small documented deviation from the f32 PyTorch conv)."""
    B, C, H, Wd = x_nchw.shape
    if H % 2 or Wd % 2:
        raise ValueError("SPDConv_Oct needs even H and W (space-to-depth by 2).")
    H2, W2 = H // 2, Wd // 2
    cin = 4 * C
    cout = bias.shape[0]
    cout_p = ((cout + 127) // 128) * 128             # lane-dense N / unmasked output stores

    # Fused bf16 pre-pass: SPD + NCHW->NHWC + 1-px halo padding (one activation pass).
    # SPD channel order matches torch.cat([x[::2,::2], x[1::2,::2], x[::2,1::2], x[1::2,1::2]]):
    # channel = (wpar*2 + hpar)*C + c.
    xs = x_nchw.astype(jnp.bfloat16).reshape(B, C, H2, 2, W2, 2)
    xs = jnp.transpose(xs, (0, 2, 4, 5, 3, 1)).reshape(B, H2, W2, cin)
    xs = jnp.pad(xs, ((0, 0), (1, 1), (1, 1), (0, 0)))           # (B, H2+2, W2+2, cin)

    # Merged weight with (ky, kx, cin) flattened into K, bf16 for the MXU; Cout padded to a
    # multiple of 128 lanes (sliced off after the kernel, fused with the NCHW transpose).
    w9 = W.reshape(9 * cin, cout).astype(jnp.bfloat16)
    b1 = bias.astype(jnp.float32)
    if cout_p != cout:
        w9 = jnp.pad(w9, ((0, 0), (0, cout_p - cout)))
        b1 = jnp.pad(b1, (0, cout_p - cout))
    b2 = b1.reshape(1, cout_p)

    vmem_limit = _vmem_limit_bytes()
    tile_h = _select_tile_h(B, H2, W2, cin, cout_p, vmem_limit)
    nb = H2 // tile_h

    out = pl.pallas_call(
        _spd_oct_conv_kernel,
        out_shape=jax.ShapeDtypeStruct((B, H2, W2, cout_p), jnp.bfloat16),
        grid_spec=pltpu.PrefetchScalarGridSpec(
            num_scalar_prefetch=0,
            grid=(B, nb),                            # (batch, row band), both parallel
            in_specs=[
                # Overlapping halo bands come from three BlockSpec views of the SAME padded
                # array: a tile_h-row main block plus the two single rows just below it.
                # This replaces the old wrapper-side jnp.take band duplication while keeping
                # everything on the auto-pipelined (double-buffered) BlockSpec path.
                pl.BlockSpec((1, tile_h, W2 + 2, cin), lambda b, r: (b, r, 0, 0)),
                pl.BlockSpec((1, 1, W2 + 2, cin),
                             lambda b, r: (b, (r + 1) * tile_h, 0, 0)),
                pl.BlockSpec((1, 1, W2 + 2, cin),
                             lambda b, r: (b, (r + 1) * tile_h + 1, 0, 0)),
                pl.BlockSpec((9 * cin, cout_p), lambda b, r: (0, 0)),
                pl.BlockSpec((1, cout_p), lambda b, r: (0, 0)),
            ],
            out_specs=pl.BlockSpec((1, tile_h, W2, cout_p), lambda b, r: (b, r, 0, 0)),
            scratch_shapes=[pltpu.VMEM((tile_h, W2, 3 * cin), jnp.bfloat16),
                            pltpu.VMEM((tile_h, W2, 3 * cin), jnp.bfloat16)],
        ),
        compiler_params=pltpu.CompilerParams(
            dimension_semantics=("parallel", "parallel"),
            vmem_limit_bytes=vmem_limit,
        ),
    )(xs, xs, xs, w9, b2)

    out = out[..., :cout]                            # drop padded channels
    return jnp.transpose(out, (0, 3, 1, 2)).astype(jnp.float32)


def _reference_forward(x_nchw, W, bias):
    """Pure-JAX f32 reference: SPD in torch.cat order + the merged 3x3 same conv."""
    spd = jnp.concatenate([x_nchw[..., ::2, ::2], x_nchw[..., 1::2, ::2],
                           x_nchw[..., ::2, 1::2], x_nchw[..., 1::2, 1::2]], axis=1)
    w_oihw = jnp.transpose(W, (3, 2, 0, 1))
    out = lax.conv_general_dilated(spd, w_oihw, window_strides=(1, 1),
                                   padding=((1, 1), (1, 1)),
                                   dimension_numbers=("NCHW", "OIHW", "NCHW"))
    return out + bias[None, :, None, None]


if __name__ == "__main__":
    inc, ouc = 4, 16
    B, H, Wd = 2, 16, 16

    key = jax.random.PRNGKey(0)
    kx, kp = jax.random.split(key)
    x = jax.random.normal(kx, (B, inc, H, Wd), dtype=jnp.float32)
    Wm, bias = init_octconv_params(kp, inc, ouc)

    out = jax.jit(spdconv_oct_forward)(x, Wm, bias)
    out = jax.block_until_ready(out)
    assert out.shape == (B, ouc, H // 2, Wd // 2), out.shape
    assert bool(jnp.all(jnp.isfinite(out)))

    ref = _reference_forward(x, Wm, bias)
    max_err = float(jnp.max(jnp.abs(out - ref)))
    assert max_err < 0.1, f"max |pallas - reference| = {max_err}"

    print("KERNEL_OK")
</pallas_src>

<mosaic_0001>
module attributes {stable_mosaic.version = 11 : i64} {
  func.func @_spd_oct_conv_kernel(%arg0: i32, %arg1: i32, %arg2: memref<1x8x10x16xbf16, #tpu.memory_space<vmem>>, %arg3: memref<1x1x10x16xbf16, #tpu.memory_space<vmem>>, %arg4: memref<1x1x10x16xbf16, #tpu.memory_space<vmem>>, %arg5: memref<144x128xbf16, #tpu.memory_space<vmem>>, %arg6: memref<1x128xf32, #tpu.memory_space<vmem>>, %arg7: memref<1x8x8x128xbf16, #tpu.memory_space<vmem>>, %arg8: memref<8x8x48xbf16, #tpu.memory_space<vmem>>, %arg9: memref<8x8x48xbf16, #tpu.memory_space<vmem>>) attributes {dimension_semantics = [#tpu.dimension_semantics<parallel>, #tpu.dimension_semantics<parallel>], iteration_bounds = array<i64: 2, 1>, scalar_prefetch = 0 : i64, scratch_operands = 2 : i64, tpu.core_type = #tpu.core_type<tc>, window_params = [{transform_indices = @transform_0, window_bounds = array<i64: 1, 8, 10, 16>}, {transform_indices = @transform_1, window_bounds = array<i64: 1, 1, 10, 16>}, {transform_indices = @transform_2, window_bounds = array<i64: 1, 1, 10, 16>}, {pipeline_mode = #tpu.pipeline_mode<synchronous>, transform_indices = @transform_3, window_bounds = array<i64: 144, 128>}, {pipeline_mode = #tpu.pipeline_mode<synchronous>, transform_indices = @transform_4, window_bounds = array<i64: 1, 128>}, {transform_indices = @transform_5, window_bounds = array<i64: 1, 8, 8, 128>}]} {
    %c0 = arith.constant 0 : index
    %c0_0 = arith.constant 0 : index
    %c0_1 = arith.constant 0 : index
    %c0_2 = arith.constant 0 : index
    %0 = vector.load %arg2[%c0, %c0_0, %c0_1, %c0_2] : memref<1x8x10x16xbf16, #tpu.memory_space<vmem>>, vector<1x8x8x16xbf16>
    %1 = vector.shape_cast %0 : vector<1x8x8x16xbf16> to vector<8x8x16xbf16>
    %c0_3 = arith.constant 0 : index
    %c0_4 = arith.constant 0 : index
    %c0_5 = arith.constant 0 : index
    %2 = vector.load %arg8[%c0_3, %c0_4, %c0_5] : memref<8x8x48xbf16, #tpu.memory_space<vmem>>, vector<8x8x16xbf16>
    tpu.vector_store %arg8[%c0_3, %c0_4, %c0_5], %1 {strides = array<i32>} : memref<8x8x48xbf16, #tpu.memory_space<vmem>>, vector<8x8x16xbf16>,
    %c0_6 = arith.constant 0 : index
    %c0_7 = arith.constant 0 : index
    %c1 = arith.constant 1 : index
    %c0_8 = arith.constant 0 : index
    %3 = vector.load %arg2[%c0_6, %c0_7, %c1, %c0_8] : memref<1x8x10x16xbf16, #tpu.memory_space<vmem>>, vector<1x8x8x16xbf16>
    %4 = vector.shape_cast %3 : vector<1x8x8x16xbf16> to vector<8x8x16xbf16>
    %c0_9 = arith.constant 0 : index
    %c0_10 = arith.constant 0 : index
    %c16 = arith.constant 16 : index
    %5 = vector.load %arg8[%c0_9, %c0_10, %c16] : memref<8x8x48xbf16, #tpu.memory_space<vmem>>, vector<8x8x16xbf16>
    tpu.vector_store %arg8[%c0_9, %c0_10, %c16], %4 {strides = array<i32>} : memref<8x8x48xbf16, #tpu.memory_space<vmem>>, vector<8x8x16xbf16>,
    %c0_11 = arith.constant 0 : index
    %c0_12 = arith.constant 0 : index
    %c2 = arith.constant 2 : index
    %c0_13 = arith.constant 0 : index
    %6 = vector.load %arg2[%c0_11, %c0_12, %c2, %c0_13] : memref<1x8x10x16xbf16, #tpu.memory_space<vmem>>, vector<1x8x8x16xbf16>
    %7 = vector.shape_cast %6 : vector<1x8x8x16xbf16> to vector<8x8x16xbf16>
    %c0_14 = arith.constant 0 : index
    %c0_15 = arith.constant 0 : index
    %c32 = arith.constant 32 : index
    %8 = vector.load %arg8[%c0_14, %c0_15, %c32] : memref<8x8x48xbf16, #tpu.memory_space<vmem>>, vector<8x8x16xbf16>
    tpu.vector_store %arg8[%c0_14, %c0_15, %c32], %7 {strides = array<i32>} : memref<8x8x48xbf16, #tpu.memory_space<vmem>>, vector<8x8x16xbf16>,
    %c0_16 = arith.constant 0 : index
    %c0_17 = arith.constant 0 : index
    %c0_18 = arith.constant 0 : index
    %9 = vector.load %arg8[%c0_16, %c0_17, %c0_18] : memref<8x8x48xbf16, #tpu.memory_space<vmem>>, vector<8x8x48xbf16>
    %10 = vector.shape_cast %9 : vector<8x8x48xbf16> to vector<64x48xbf16>
    %c0_19 = arith.constant 0 : index
    %c0_20 = arith.constant 0 : index
    %11 = vector.load %arg5[%c0_19, %c0_20] : memref<144x128xbf16, #tpu.memory_space<vmem>>, vector<48x128xbf16>
    %cst = arith.constant dense<0.000000e+00> : vector<64x128xf32>
    %12 = tpu.matmul %10, %11, %cst {dimension_numbers = #tpu.dot_dimension_numbers<[1], [0], [0], [1], [0, 0, 1, 1], [], []>} : vector<64x48xbf16>, vector<48x128xbf16>, vector<64x128xf32> -> vector<64x128xf32>
    %c0_21 = arith.constant 0 : index
    %c1_22 = arith.constant 1 : index
    %c0_23 = arith.constant 0 : index
    %c0_24 = arith.constant 0 : index
    %13 = vector.load %arg2[%c0_21, %c1_22, %c0_23, %c0_24] : memref<1x8x10x16xbf16, #tpu.memory_space<vmem>>, vector<1x7x8x16xbf16>
    %14 = vector.shape_cast %13 : vector<1x7x8x16xbf16> to vector<7x8x16xbf16>
    %c0_25 = arith.constant 0 : index
    %c0_26 = arith.constant 0 : index
    %c0_27 = arith.constant 0 : index
    %15 = vector.load %arg9[%c0_25, %c0_26, %c0_27] : memref<8x8x48xbf16, #tpu.memory_space<vmem>>, vector<7x8x16xbf16>
    tpu.vector_store %arg9[%c0_25, %c0_26, %c0_27], %14 {strides = array<i32>} : memref<8x8x48xbf16, #tpu.memory_space<vmem>>, vector<7x8x16xbf16>,
    %c0_28 = arith.constant 0 : index
    %c0_29 = arith.constant 0 : index
    %c0_30 = arith.constant 0 : index
    %c0_31 = arith.constant 0 : index
    %16 = vector.load %arg3[%c0_28, %c0_29, %c0_30, %c0_31] : memref<1x1x10x16xbf16, #tpu.memory_space<vmem>>, vector<1x1x8x16xbf16>
    %17 = vector.shape_cast %16 : vector<1x1x8x16xbf16> to vector<8x16xbf16>
    %c7 = arith.constant 7 : index
    %c0_32 = arith.constant 0 : index
    %c0_33 = arith.constant 0 : index
    %18 = vector.load %arg9[%c7, %c0_32, %c0_33] : memref<8x8x48xbf16, #tpu.memory_space<vmem>>, vector<1x8x16xbf16>
    %19 = vector.shape_cast %18 : vector<1x8x16xbf16> to vector<8x16xbf16>
    %20 = vector.shape_cast %17 : vector<8x16xbf16> to vector<1x8x16xbf16>
    tpu.vector_store %arg9[%c7, %c0_32, %c0_33], %20 {strides = array<i32>} : memref<8x8x48xbf16, #tpu.memory_space<vmem>>, vector<1x8x16xbf16>,
    %c0_34 = arith.constant 0 : index
    %c1_35 = arith.constant 1 : index
    %c1_36 = arith.constant 1 : index
    %c0_37 = arith.constant 0 : index
    %21 = vector.load %arg2[%c0_34, %c1_35, %c1_36, %c0_37] : memref<1x8x10x16xbf16, #tpu.memory_space<vmem>>, vector<1x7x8x16xbf16>
    %22 = vector.shape_cast %21 : vector<1x7x8x16xbf16> to vector<7x8x16xbf16>
    %c0_38 = arith.constant 0 : index
    %c0_39 = arith.constant 0 : index
    %c16_40 = arith.constant 16 : index
    %23 = vector.load %arg9[%c0_38, %c0_39, %c16_40] : memref<8x8x48xbf16, #tpu.memory_space<vmem>>, vector<7x8x16xbf16>
    tpu.vector_store %arg9[%c0_38, %c0_39, %c16_40], %22 {strides = array<i32>} : memref<8x8x48xbf16, #tpu.memory_space<vmem>>, vector<7x8x16xbf16>,
    %c0_41 = arith.constant 0 : index
    %c0_42 = arith.constant 0 : index
    %c1_43 = arith.constant 1 : index
    %c0_44 = arith.constant 0 : index
    %24 = vector.load %arg3[%c0_41, %c0_42, %c1_43, %c0_44] : memref<1x1x10x16xbf16, #tpu.memory_space<vmem>>, vector<1x1x8x16xbf16>
    %25 = vector.shape_cast %24 : vector<1x1x8x16xbf16> to vector<8x16xbf16>
    %c7_45 = arith.constant 7 : index
    %c0_46 = arith.constant 0 : index
    %c16_47 = arith.constant 16 : index
    %26 = vector.load %arg9[%c7_45, %c0_46, %c16_47] : memref<8x8x48xbf16, #tpu.memory_space<vmem>>, vector<1x8x16xbf16>
    %27 = vector.shape_cast %26 : vector<1x8x16xbf16> to vector<8x16xbf16>
    %28 = vector.shape_cast %25 : vector<8x16xbf16> to vector<1x8x16xbf16>
    tpu.vector_store %arg9[%c7_45, %c0_46, %c16_47], %28 {strides = array<i32>} : memref<8x8x48xbf16, #tpu.memory_space<vmem>>, vector<1x8x16xbf16>,
    %c0_48 = arith.constant 0 : index
    %c1_49 = arith.constant 1 : index
    %c2_50 = arith.constant 2 : index
    %c0_51 = arith.constant 0 : index
    %29 = vector.load %arg2[%c0_48, %c1_49, %c2_50, %c0_51] : memref<1x8x10x16xbf16, #tpu.memory_space<vmem>>, vector<1x7x8x16xbf16>
    %30 = vector.shape_cast %29 : vector<1x7x8x16xbf16> to vector<7x8x16xbf16>
    %c0_52 = arith.constant 0 : index
    %c0_53 = arith.constant 0 : index
    %c32_54 = arith.constant 32 : index
    %31 = vector.load %arg9[%c0_52, %c0_53, %c32_54] : memref<8x8x48xbf16, #tpu.memory_space<vmem>>, vector<7x8x16xbf16>
    tpu.vector_store %arg9[%c0_52, %c0_53, %c32_54], %30 {strides = array<i32>} : memref<8x8x48xbf16, #tpu.memory_space<vmem>>, vector<7x8x16xbf16>,
    %c0_55 = arith.constant 0 : index
    %c0_56 = arith.constant 0 : index
    %c2_57 = arith.constant 2 : index
    %c0_58 = arith.constant 0 : index
    %32 = vector.load %arg3[%c0_55, %c0_56, %c2_57, %c0_58] : memref<1x1x10x16xbf16, #tpu.memory_space<vmem>>, vector<1x1x8x16xbf16>
    %33 = vector.shape_cast %32 : vector<1x1x8x16xbf16> to vector<8x16xbf16>
    %c7_59 = arith.constant 7 : index
    %c0_60 = arith.constant 0 : index
    %c32_61 = arith.constant 32 : index
    %34 = vector.load %arg9[%c7_59, %c0_60, %c32_61] : memref<8x8x48xbf16, #tpu.memory_space<vmem>>, vector<1x8x16xbf16>
    %35 = vector.shape_cast %34 : vector<1x8x16xbf16> to vector<8x16xbf16>
    %36 = vector.shape_cast %33 : vector<8x16xbf16> to vector<1x8x16xbf16>
    tpu.vector_store %arg9[%c7_59, %c0_60, %c32_61], %36 {strides = array<i32>} : memref<8x8x48xbf16, #tpu.memory_space<vmem>>, vector<1x8x16xbf16>,
    %c0_62 = arith.constant 0 : index
    %c0_63 = arith.constant 0 : index
    %c0_64 = arith.constant 0 : index
    %37 = vector.load %arg9[%c0_62, %c0_63, %c0_64] : memref<8x8x48xbf16, #tpu.memory_space<vmem>>, vector<8x8x48xbf16>
    %38 = vector.shape_cast %37 : vector<8x8x48xbf16> to vector<64x48xbf16>
    %c48 = arith.constant 48 : index
    %c0_65 = arith.constant 0 : index
    %39 = vector.load %arg5[%c48, %c0_65] : memref<144x128xbf16, #tpu.memory_space<vmem>>, vector<48x128xbf16>
    %cst_66 = arith.constant dense<0.000000e+00> : vector<64x128xf32>
    %40 = tpu.matmul %38, %39, %cst_66 {dimension_numbers = #tpu.dot_dimension_numbers<[1], [0], [0], [1], [0, 0, 1, 1], [], []>} : vector<64x48xbf16>, vector<48x128xbf16>, vector<64x128xf32> -> vector<64x128xf32>
    %41 = arith.addf %12, %40 : vector<64x128xf32>
    %c0_67 = arith.constant 0 : index
    %c2_68 = arith.constant 2 : index
    %c0_69 = arith.constant 0 : index
    %c0_70 = arith.constant 0 : index
    %42 = vector.load %arg2[%c0_67, %c2_68, %c0_69, %c0_70] : memref<1x8x10x16xbf16, #tpu.memory_space<vmem>>, vector<1x6x8x16xbf16>
    %43 = vector.shape_cast %42 : vector<1x6x8x16xbf16> to vector<6x8x16xbf16>
    %c0_71 = arith.constant 0 : index
    %c0_72 = arith.constant 0 : index
    %c0_73 = arith.constant 0 : index
    %44 = vector.load %arg8[%c0_71, %c0_72, %c0_73] : memref<8x8x48xbf16, #tpu.memory_space<vmem>>, vector<6x8x16xbf16>
    tpu.vector_store %arg8[%c0_71, %c0_72, %c0_73], %43 {strides = array<i32>} : memref<8x8x48xbf16, #tpu.memory_space<vmem>>, vector<6x8x16xbf16>,
    %c0_74 = arith.constant 0 : index
    %c0_75 = arith.constant 0 : index
    %c0_76 = arith.constant 0 : index
    %c0_77 = arith.constant 0 : index
    %45 = vector.load %arg3[%c0_74, %c0_75, %c0_76, %c0_77] : memref<1x1x10x16xbf16, #tpu.memory_space<vmem>>, vector<1x1x8x16xbf16>
    %46 = vector.shape_cast %45 : vector<1x1x8x16xbf16> to vector<8x16xbf16>
    %c6 = arith.constant 6 : index
    %c0_78 = arith.constant 0 : index
    %c0_79 = arith.constant 0 : index
    %47 = vector.load %arg8[%c6, %c0_78, %c0_79] : memref<8x8x48xbf16, #tpu.memory_space<vmem>>, vector<1x8x16xbf16>
    %48 = vector.shape_cast %47 : vector<1x8x16xbf16> to vector<8x16xbf16>
    %49 = vector.shape_cast %46 : vector<8x16xbf16> to vector<1x8x16xbf16>
    tpu.vector_store %arg8[%c6, %c0_78, %c0_79], %49 {strides = array<i32>} : memref<8x8x48xbf16, #tpu.memory_space<vmem>>, vector<1x8x16xbf16>,
    %c0_80 = arith.constant 0 : index
    %c0_81 = arith.constant 0 : index
    %c0_82 = arith.constant 0 : index
    %c0_83 = arith.constant 0 : index
    %50 = vector.load %arg4[%c0_80, %c0_81, %c0_82, %c0_83] : memref<1x1x10x16xbf16, #tpu.memory_space<vmem>>, vector<1x1x8x16xbf16>
    %51 = vector.shape_cast %50 : vector<1x1x8x16xbf16> to vector<8x16xbf16>
    %c7_84 = arith.constant 7 : index
    %c0_85 = arith.constant 0 : index
    %c0_86 = arith.constant 0 : index
    %52 = vector.load %arg8[%c7_84, %c0_85, %c0_86] : memref<8x8x48xbf16, #tpu.memory_space<vmem>>, vector<1x8x16xbf16>
    %53 = vector.shape_cast %52 : vector<1x8x16xbf16> to vector<8x16xbf16>
    %54 = vector.shape_cast %51 : vector<8x16xbf16> to vector<1x8x16xbf16>
    tpu.vector_store %arg8[%c7_84, %c0_85, %c0_86], %54 {strides = array<i32>} : memref<8x8x48xbf16, #tpu.memory_space<vmem>>, vector<1x8x16xbf16>,
    %c0_87 = arith.constant 0 : index
    %c2_88 = arith.constant 2 : index
    %c1_89 = arith.constant 1 : index
    %c0_90 = arith.constant 0 : index
    %55 = vector.load %arg2[%c0_87, %c2_88, %c1_89, %c0_90] : memref<1x8x10x16xbf16, #tpu.memory_space<vmem>>, vector<1x6x8x16xbf16>
    %56 = vector.shape_cast %55 : vector<1x6x8x16xbf16> to vector<6x8x16xbf16>
    %c0_91 = arith.constant 0 : index
    %c0_92 = arith.constant 0 : index
    %c16_93 = arith.constant 16 : index
    %57 = vector.load %arg8[%c0_91, %c0_92, %c16_93] : memref<8x8x48xbf16, #tpu.memory_space<vmem>>, vector<6x8x16xbf16>
    tpu.vector_store %arg8[%c0_91, %c0_92, %c16_93], %56 {strides = array<i32>} : memref<8x8x48xbf16, #tpu.memory_space<vmem>>, vector<6x8x16xbf16>,
    %c0_94 = arith.constant 0 : index
    %c0_95 = arith.constant 0 : index
    %c1_96 = arith.constant 1 : index
    %c0_97 = arith.constant 0 : index
    %58 = vector.load %arg3[%c0_94, %c0_95, %c1_96, %c0_97] : memref<1x1x10x16xbf16, #tpu.memory_space<vmem>>, vector<1x1x8x16xbf16>
    %59 = vector.shape_cast %58 : vector<1x1x8x16xbf16> to vector<8x16xbf16>
    %c6_98 = arith.constant 6 : index
    %c0_99 = arith.constant 0 : index
    %c16_100 = arith.constant 16 : index
    %60 = vector.load %arg8[%c6_98, %c0_99, %c16_100] : memref<8x8x48xbf16, #tpu.memory_space<vmem>>, vector<1x8x16xbf16>
    %61 = vector.shape_cast %60 : vector<1x8x16xbf16> to vector<8x16xbf16>
    %62 = vector.shape_cast %59 : vector<8x16xbf16> to vector<1x8x16xbf16>
    tpu.vector_store %arg8[%c6_98, %c0_99, %c16_100], %62 {strides = array<i32>} : memref<8x8x48xbf16, #tpu.memory_space<vmem>>, vector<1x8x16xbf16>,
    %c0_101 = arith.constant 0 : index
    %c0_102 = arith.constant 0 : index
    %c1_103 = arith.constant 1 : index
    %c0_104 = arith.constant 0 : index
    %63 = vector.load %arg4[%c0_101, %c0_102, %c1_103, %c0_104] : memref<1x1x10x16xbf16, #tpu.memory_space<vmem>>, vector<1x1x8x16xbf16>
    %64 = vector.shape_cast %63 : vector<1x1x8x16xbf16> to vector<8x16xbf16>
    %c7_105 = arith.constant 7 : index
    %c0_106 = arith.constant 0 : index
    %c16_107 = arith.constant 16 : index
    %65 = vector.load %arg8[%c7_105, %c0_106, %c16_107] : memref<8x8x48xbf16, #tpu.memory_space<vmem>>, vector<1x8x16xbf16>
    %66 = vector.shape_cast %65 : vector<1x8x16xbf16> to vector<8x16xbf16>
    %67 = vector.shape_cast %64 : vector<8x16xbf16> to vector<1x8x16xbf16>
    tpu.vector_store %arg8[%c7_105, %c0_106, %c16_107], %67 {strides = array<i32>} : memref<8x8x48xbf16, #tpu.memory_space<vmem>>, vector<1x8x16xbf16>,
    %c0_108 = arith.constant 0 : index
    %c2_109 = arith.constant 2 : index
    %c2_110 = arith.constant 2 : index
    %c0_111 = arith.constant 0 : index
    %68 = vector.load %arg2[%c0_108, %c2_109, %c2_110, %c0_111] : memref<1x8x10x16xbf16, #tpu.memory_space<vmem>>, vector<1x6x8x16xbf16>
    %69 = vector.shape_cast %68 : vector<1x6x8x16xbf16> to vector<6x8x16xbf16>
    %c0_112 = arith.constant 0 : index
    %c0_113 = arith.constant 0 : index
    %c32_114 = arith.constant 32 : index
    %70 = vector.load %arg8[%c0_112, %c0_113, %c32_114] : memref<8x8x48xbf16, #tpu.memory_space<vmem>>, vector<6x8x16xbf16>
    tpu.vector_store %arg8[%c0_112, %c0_113, %c32_114], %69 {strides = array<i32>} : memref<8x8x48xbf16, #tpu.memory_space<vmem>>, vector<6x8x16xbf16>,
    %c0_115 = arith.constant 0 : index
    %c0_116 = arith.constant 0 : index
    %c2_117 = arith.constant 2 : index
    %c0_118 = arith.constant 0 : index
    %71 = vector.load %arg3[%c0_115, %c0_116, %c2_117, %c0_118] : memref<1x1x10x16xbf16, #tpu.memory_space<vmem>>, vector<1x1x8x16xbf16>
    %72 = vector.shape_cast %71 : vector<1x1x8x16xbf16> to vector<8x16xbf16>
    %c6_119 = arith.constant 6 : index
    %c0_120 = arith.constant 0 : index
    %c32_121 = arith.constant 32 : index
    %73 = vector.load %arg8[%c6_119, %c0_120, %c32_121] : memref<8x8x48xbf16, #tpu.memory_space<vmem>>, vector<1x8x16xbf16>
    %74 = vector.shape_cast %73 : vector<1x8x16xbf16> to vector<8x16xbf16>
    %75 = vector.shape_cast %72 : vector<8x16xbf16> to vector<1x8x16xbf16>
    tpu.vector_store %arg8[%c6_119, %c0_120, %c32_121], %75 {strides = array<i32>} : memref<8x8x48xbf16, #tpu.memory_space<vmem>>, vector<1x8x16xbf16>,
    %c0_122 = arith.constant 0 : index
    %c0_123 = arith.constant 0 : index
    %c2_124 = arith.constant 2 : index
    %c0_125 = arith.constant 0 : index
    %76 = vector.load %arg4[%c0_122, %c0_123, %c2_124, %c0_125] : memref<1x1x10x16xbf16, #tpu.memory_space<vmem>>, vector<1x1x8x16xbf16>
    %77 = vector.shape_cast %76 : vector<1x1x8x16xbf16> to vector<8x16xbf16>
    %c7_126 = arith.constant 7 : index
    %c0_127 = arith.constant 0 : index
    %c32_128 = arith.constant 32 : index
    %78 = vector.load %arg8[%c7_126, %c0_127, %c32_128] : memref<8x8x48xbf16, #tpu.memory_space<vmem>>, vector<1x8x16xbf16>
    %79 = vector.shape_cast %78 : vector<1x8x16xbf16> to vector<8x16xbf16>
    %80 = vector.shape_cast %77 : vector<8x16xbf16> to vector<1x8x16xbf16>
    tpu.vector_store %arg8[%c7_126, %c0_127, %c32_128], %80 {strides = array<i32>} : memref<8x8x48xbf16, #tpu.memory_space<vmem>>, vector<1x8x16xbf16>,
    %c0_129 = arith.constant 0 : index
    %c0_130 = arith.constant 0 : index
    %c0_131 = arith.constant 0 : index
    %81 = vector.load %arg8[%c0_129, %c0_130, %c0_131] : memref<8x8x48xbf16, #tpu.memory_space<vmem>>, vector<8x8x48xbf16>
    %82 = vector.shape_cast %81 : vector<8x8x48xbf16> to vector<64x48xbf16>
    %c96 = arith.constant 96 : index
    %c0_132 = arith.constant 0 : index
    %83 = vector.load %arg5[%c96, %c0_132] : memref<144x128xbf16, #tpu.memory_space<vmem>>, vector<48x128xbf16>
    %cst_133 = arith.constant dense<0.000000e+00> : vector<64x128xf32>
    %84 = tpu.matmul %82, %83, %cst_133 {dimension_numbers = #tpu.dot_dimension_numbers<[1], [0], [0], [1], [0, 0, 1, 1], [], []>} : vector<64x48xbf16>, vector<48x128xbf16>, vector<64x128xf32> -> vector<64x128xf32>
    %85 = arith.addf %41, %84 : vector<64x128xf32>
    %c0_134 = arith.constant 0 : index
    %c0_135 = arith.constant 0 : index
    %86 = vector.load %arg6[%c0_134, %c0_135] : memref<1x128xf32, #tpu.memory_space<vmem>>, vector<1x128xf32>
    %87 = vector.broadcast %86 : vector<1x128xf32> to vector<64x128xf32>
    %88 = arith.addf %85, %87 : vector<64x128xf32>
    %89 = vector.shape_cast %88 : vector<64x128xf32> to vector<8x8x128xf32>
    %90 = arith.truncf %89 : vector<8x8x128xf32> to vector<8x8x128xbf16>
    %c0_136 = arith.constant 0 : index
    %c0_137 = arith.constant 0 : index
    %c0_138 = arith.constant 0 : index
    %c0_139 = arith.constant 0 : index
    %91 = vector.load %arg7[%c0_136, %c0_137, %c0_138, %c0_139] : memref<1x8x8x128xbf16, #tpu.memory_space<vmem>>, vector<1x8x8x128xbf16>
    %92 = vector.shape_cast %91 : vector<1x8x8x128xbf16> to vector<8x8x128xbf16>
    %93 = vector.shape_cast %90 : vector<8x8x128xbf16> to vector<1x8x8x128xbf16>
    tpu.vector_store %arg7[%c0_136, %c0_137, %c0_138, %c0_139], %93 {strides = array<i32>} : memref<1x8x8x128xbf16, #tpu.memory_space<vmem>>, vector<1x8x8x128xbf16>,
    return
  }
  func.func @transform_0(%arg0: i32, %arg1: i32) -> (i32, i32, i32, i32) {
    %c0_i32 = arith.constant 0 : i32
    %c0_i32_0 = arith.constant 0 : i32
    %c0_i32_1 = arith.constant 0 : i32
    return %arg0, %arg1, %c0_i32, %c0_i32_0 : i32, i32, i32, i32
  }
  func.func @transform_1(%arg0: i32, %arg1: i32) -> (i32, i32, i32, i32) {
    %c1_i32 = arith.constant 1 : i32
    %0 = arith.addi %arg1, %c1_i32 : i32
    %c8_i32 = arith.constant 8 : i32
    %1 = arith.muli %0, %c8_i32 : i32
    %c0_i32 = arith.constant 0 : i32
    %c0_i32_0 = arith.constant 0 : i32
    %c0_i32_1 = arith.constant 0 : i32
    return %arg0, %1, %c0_i32, %c0_i32_0 : i32, i32, i32, i32
  }
  func.func @transform_2(%arg0: i32, %arg1: i32) -> (i32, i32, i32, i32) {
    %c1_i32 = arith.constant 1 : i32
    %0 = arith.addi %arg1, %c1_i32 : i32
    %c8_i32 = arith.constant 8 : i32
    %1 = arith.muli %0, %c8_i32 : i32
    %c1_i32_0 = arith.constant 1 : i32
    %2 = arith.addi %1, %c1_i32_0 : i32
    %c0_i32 = arith.constant 0 : i32
    %c0_i32_1 = arith.constant 0 : i32
    %c0_i32_2 = arith.constant 0 : i32
    return %arg0, %2, %c0_i32, %c0_i32_1 : i32, i32, i32, i32
  }
  func.func @transform_3(%arg0: i32, %arg1: i32) -> (i32, i32) {
    %c0_i32 = arith.constant 0 : i32
    %c0_i32_0 = arith.constant 0 : i32
    %c0_i32_1 = arith.constant 0 : i32
    return %c0_i32, %c0_i32_0 : i32, i32
  }
  func.func @transform_4(%arg0: i32, %arg1: i32) -> (i32, i32) {
    %c0_i32 = arith.constant 0 : i32
    %c0_i32_0 = arith.constant 0 : i32
    %c0_i32_1 = arith.constant 0 : i32
    return %c0_i32, %c0_i32_0 : i32, i32
  }
  func.func @transform_5(%arg0: i32, %arg1: i32) -> (i32, i32, i32, i32) {
    %c0_i32 = arith.constant 0 : i32
    %c0_i32_0 = arith.constant 0 : i32
    %c0_i32_1 = arith.constant 0 : i32
    return %arg0, %arg1, %c0_i32, %c0_i32_0 : i32, i32, i32, i32
  }
}

</mosaic_0001>

<llo_original>
// kernel: spdconv_oct_forward.1
$region0: #{spdconv_oct_forward.1}
  #allocation0 [shape = 'u32[]', space=smem, size = 0x4, offset = 0x4, fixed_abs, tag = 'smem constant byte address 0x4 - core index']
  #allocation1 [shape = 'u32[144,128]{1,0:T(1,128)}', space=vmem, size = 0x12000, scoped, tag = 'internal scratch']
  #allocation2 [shape = 'bf16[8,8,48]{2,1,0:T(8,128)(2,1)}', space=vmem, size = 0x4000, scoped, tag = 'scratch operand']
  #allocation3 [shape = 'bf16[8,8,48]{2,1,0:T(8,128)(2,1)}', space=vmem, size = 0x4000, scoped, tag = 'scratch operand']
  %s0 = inlined_call_operand.vmem [shape: bf16[2,10,10,16], index: 0, kind: input, shape index: {}, may-alias: {0,1,2}]
  %s1 = inlined_call_operand.vmem [shape: bf16[2,10,10,16], index: 1, kind: input, shape index: {}, may-alias: {0,1,2}]
  %s2 = inlined_call_operand.vmem [shape: bf16[2,10,10,16], index: 2, kind: input, shape index: {}, may-alias: {0,1,2}]
  %s3 = inlined_call_operand.vmem [shape: bf16[144,128], index: 3, kind: input, shape index: {}]
  %s4 = inlined_call_operand.vmem [shape: f32[1,128], index: 4, kind: input, shape index: {}]
  %s5 = inlined_call_operand.vmem [shape: bf16[2,8,8,128], index: 5, kind: output, shape index: {}]
  %s6 = sld [smem:[#allocation0]]
  $region53: #{spdconv_oct_forward.1} parent=0
    _
  %s8 = ssub.s32 1, %s6
  %s9 = scalar_select 0, %s8, %s6
  loop: start=0, step=1, limit=4
  $region2: #{spdconv_oct_forward.1} parent=0 // loop_pre_header
    _
  $region3: #{spdconv_oct_forward.1} parent=0 // loop_header
    %s11 = sphi 0, %s15
    %p12 = scmp.ge.s32.totalorder %s11, 4
    %s18 = sphi 0, %s30
    %s19 = sphi 0, %s26
    %s20 = sphi 0, %s18
    %s21 = sphi 0, %s19
    %s22 = sphi 0, %s20
    %s23 = sphi 0, %s21
    %s35 = sphi 0, %s37
    %s38 = sphi 0, %s35
    %s39 = sphi 0, %s38
    %s55 = sphi 0, %s39
    %s67 = sphi 0, %s69
    %s70 = sphi 0, %s67
    %s71 = sphi 0, %s70
    %s87 = sphi 0, %s71
    %s101 = sphi 0, %s103
    %s104 = sphi 0, %s101
    %s105 = sphi 0, %s104
    %s121 = sphi 0, %s105
    %s125 = sphi 0, %s125
    %s127 = sphi 0, %s125
    %s128 = sphi 0, %s127
    %s142 = sphi 0, %s128
    %s146 = sphi 0, %s146
    %s148 = sphi 0, %s146
    %s149 = sphi 0, %s148
    %s163 = sphi 0, %s149
    %s171 = sphi 0, %s173
    %s174 = sphi 0, %s171
    %s175 = sphi 0, %s174
    %s191 = sphi 0, %s175
  $region4: #{spdconv_oct_forward.1} parent=0 // loop_header_branch
    %14 = sbr.rel (%p12) target = $region8
  $region5: #{spdconv_oct_forward.1} parent=0 // loop_body
    %s16 = ssub.s32 %s11, 1
    %s17 = ssub.s32 %s11, 2
    %s24 = sadd.s32 1, %s19
    %p25 = scmp.ge.s32.totalorder %s24, 1
    %s26 = scalar_select %p25, 0, %s24
    %s27 = sadd.s32 1, %s18
    %s28 = scalar_select %p25, %s27, %s18
    %p29 = scmp.ge.s32.totalorder %s28, 2
    %s30 = scalar_select %p29, 0, %s28
    %s31 = ssub.s32 %s18, %s30
    %s32 = ssub.s32 %s19, %s26
    %s33 = sor.u32 %s31, %s32
    %p34 = scmp.eq.s32.totalorder %s33, 0
    %s36 = sadd.s32 %s35, 1
    %s37 = scalar_select %p34, %s35, %s36
    %p40 = pneg %p34
    %p41 = scmp.eq.s32.totalorder %s11, 1
    %p42 = por %p40, %p41
    %p43 = scmp.ne.s32.totalorder %s35, %s38
    %p44 = scmp.eq.s32.totalorder %s11, 0
    %p45 = por %p43, %p44
    %p46 = scmp.ne.s32.totalorder %s35, %s38
    %p47 = scmp.eq.s32.totalorder %s16, 1
    %p48 = por %p46, %p47
    %p49 = scmp.ne.s32.totalorder %s38, %s39
    %p50 = scmp.eq.s32.totalorder %s16, 0
    %p51 = por %p49, %p50
    %p52 = scmp.ne.s32.totalorder %s38, %s39
    %p53 = scmp.eq.s32.totalorder %s17, 1
    %p54 = por %p52, %p53
    %p56 = scmp.ne.s32.totalorder %s39, %s55
    %p57 = scmp.eq.s32.totalorder %s17, 0
    %p58 = por %p56, %p57
    %s59 = sadd.s32 %s19, 1
    %s60 = smul.u32 %s59, 8
    %s61 = sadd.s32 %s26, 1
    %s62 = smul.u32 %s61, 8
    %s63 = ssub.s32 %s18, %s30
    %s64 = ssub.s32 %s60, %s62
    %s65 = sor.u32 %s63, %s64
    %p66 = scmp.eq.s32.totalorder %s65, 0
    %s68 = sadd.s32 %s67, 1
    %s69 = scalar_select %p66, %s67, %s68
    %p72 = pneg %p66
    %p73 = scmp.eq.s32.totalorder %s11, 1
    %p74 = por %p72, %p73
    %p75 = scmp.ne.s32.totalorder %s67, %s70
    %p76 = scmp.eq.s32.totalorder %s11, 0
    %p77 = por %p75, %p76
    %p78 = scmp.ne.s32.totalorder %s67, %s70
    %p79 = scmp.eq.s32.totalorder %s16, 1
    %p80 = por %p78, %p79
    %p81 = scmp.ne.s32.totalorder %s70, %s71
    %p82 = scmp.eq.s32.totalorder %s16, 0
    %p83 = por %p81, %p82
    %p84 = scmp.ne.s32.totalorder %s70, %s71
    %p85 = scmp.eq.s32.totalorder %s17, 1
    %p86 = por %p84, %p85
    %p88 = scmp.ne.s32.totalorder %s71, %s87
    %p89 = scmp.eq.s32.totalorder %s17, 0
    %p90 = por %p88, %p89
    %s91 = sadd.s32 %s19, 1
    %s92 = smul.u32 %s91, 8
    %s93 = sadd.s32 %s92, 1
    %s94 = sadd.s32 %s26, 1
    %s95 = smul.u32 %s94, 8
    %s96 = sadd.s32 %s95, 1
    %s97 = ssub.s32 %s18, %s30
    %s98 = ssub.s32 %s93, %s96
    %s99 = sor.u32 %s97, %s98
    %p100 = scmp.eq.s32.totalorder %s99, 0
    %s102 = sadd.s32 %s101, 1
    %s103 = scalar_select %p100, %s101, %s102
    %p106 = pneg %p100
    %p107 = scmp.eq.s32.totalorder %s11, 1
    %p108 = por %p106, %p107
    %p109 = scmp.ne.s32.totalorder %s101, %s104
    %p110 = scmp.eq.s32.totalorder %s11, 0
    %p111 = por %p109, %p110
    %p112 = scmp.ne.s32.totalorder %s101, %s104
    %p113 = scmp.eq.s32.totalorder %s16, 1
    %p114 = por %p112, %p113
    %p115 = scmp.ne.s32.totalorder %s104, %s105
    %p116 = scmp.eq.s32.totalorder %s16, 0
    %p117 = por %p115, %p116
    %p118 = scmp.ne.s32.totalorder %s104, %s105
    %p119 = scmp.eq.s32.totalorder %s17, 1
    %p120 = por %p118, %p119
    %p122 = scmp.ne.s32.totalorder %s105, %s121
    %p123 = scmp.eq.s32.totalorder %s17, 0
    %p124 = por %p122, %p123
    %s126 = sadd.s32 %s125, 1
    %p129 = scmp.eq.s32.totalorder %s11, 1
    %p130 = scmp.ne.s32.totalorder %s125, %s127
    %p131 = scmp.eq.s32.totalorder %s11, 0
    %p132 = por %p130, %p131
    %p133 = scmp.ne.s32.totalorder %s125, %s127
    %p134 = scmp.eq.s32.totalorder %s16, 1
    %p135 = por %p133, %p134
    %p136 = scmp.ne.s32.totalorder %s127, %s128
    %p137 = scmp.eq.s32.totalorder %s16, 0
    %p138 = por %p136, %p137
    %p139 = scmp.ne.s32.totalorder %s127, %s128
    %p140 = scmp.eq.s32.totalorder %s17, 1
    %p141 = por %p139, %p140
    %p143 = scmp.ne.s32.totalorder %s128, %s142
    %p144 = scmp.eq.s32.totalorder %s17, 0
    %p145 = por %p143, %p144
    %s147 = sadd.s32 %s146, 1
    %p150 = scmp.eq.s32.totalorder %s11, 1
    %p151 = scmp.ne.s32.totalorder %s146, %s148
    %p152 = scmp.eq.s32.totalorder %s11, 0
    %p153 = por %p151, %p152
    %p154 = scmp.ne.s32.totalorder %s146, %s148
    %p155 = scmp.eq.s32.totalorder %s16, 1
    %p156 = por %p154, %p155
    %p157 = scmp.ne.s32.totalorder %s148, %s149
    %p158 = scmp.eq.s32.totalorder %s16, 0
    %p159 = por %p157, %p158
    %p160 = scmp.ne.s32.totalorder %s148, %s149
    %p161 = scmp.eq.s32.totalorder %s17, 1
    %p162 = por %p160, %p161
    %p164 = scmp.ne.s32.totalorder %s149, %s163
    %p165 = scmp.eq.s32.totalorder %s17, 0
    %p166 = por %p164, %p165
    %s167 = ssub.s32 %s18, %s30
    %s168 = ssub.s32 %s19, %s26
    %s169 = sor.u32 %s167, %s168
    %p170 = scmp.eq.s32.totalorder %s169, 0
    %s172 = sadd.s32 %s171, 1
    %s173 = scalar_select %p170, %s171, %s172
    %p176 = pneg %p170
    %p177 = scmp.eq.s32.totalorder %s11, 1
    %p178 = por %p176, %p177
    %p179 = scmp.ne.s32.totalorder %s171, %s174
    %p180 = scmp.eq.s32.totalorder %s11, 0
    %p181 = por %p179, %p180
    %p182 = scmp.ne.s32.totalorder %s171, %s174
    %p183 = scmp.eq.s32.totalorder %s16, 1
    %p184 = por %p182, %p183
    %p185 = scmp.ne.s32.totalorder %s174, %s175
    %p186 = scmp.eq.s32.totalorder %s16, 0
    %p187 = por %p185, %p186
    %p188 = scmp.ne.s32.totalorder %s174, %s175
    %p189 = scmp.eq.s32.totalorder %s17, 1
    %p190 = por %p188, %p189
    %p192 = scmp.ne.s32.totalorder %s175, %s191
    %p193 = scmp.eq.s32.totalorder %s17, 0
    %p194 = por %p192, %p193
    %p195 = scmp.le.s32.totalorder 1, %s11
    %p196 = scmp.lt.s32.totalorder %s11, 3
    %p197 = pnand %p195, %p196
    %p198 = pneg %p197
    // Predicated region
    $region9: #{spdconv_oct_forward.1} parent=5 // pred_check
      _
    $region10: #{spdconv_oct_forward.1} parent=5 // pred_check_branch
      %200 = sbr.rel (%p197) target = $region12
    $region11: #{spdconv_oct_forward.1} parent=5 // pred_region
      %s201 = ssub.s32 %s11, 1
      // Predicated region
      $region13: #{spdconv_oct_forward.1} parent=11 // pred_check
        %p202 = pneg %p138
      $region14: #{spdconv_oct_forward.1} parent=11 // pred_check_branch
        %204 = sbr.rel (%p202) target = $region16
      $region15: #{spdconv_oct_forward.1} parent=11 // pred_region
        _
      $region16: #{spdconv_oct_forward.1} parent=11 // pred_fallthru
        _
      // Predicated region
      $region17: #{spdconv_oct_forward.1} parent=11 // pred_check
        %p205 = pneg %p159
      $region18: #{spdconv_oct_forward.1} parent=11 // pred_check_branch
        %207 = sbr.rel (%p205) target = $region20
      $region19: #{spdconv_oct_forward.1} parent=11 // pred_region
        _
      $region20: #{spdconv_oct_forward.1} parent=11 // pred_fallthru
        _
    $region12: #{spdconv_oct_forward.1} parent=5 // pred_fallthru
      _
    %p208 = scmp.lt.s32.totalorder %s11, 2
    // Predicated region
    $region21: #{spdconv_oct_forward.1} parent=5 // pred_check
      %p209 = pneg %p208
    $region22: #{spdconv_oct_forward.1} parent=5 // pred_check_branch
      %211 = sbr.rel (%p209) target = $region24
    $region23: #{spdconv_oct_forward.1} parent=5 // pred_region
      // Predicated region
      $region25: #{spdconv_oct_forward.1} parent=23 // pred_check
        %p212 = pneg %p45
      $region26: #{spdconv_oct_forward.1} parent=23 // pred_check_branch
        %214 = sbr.rel (%p212) target = $region28
      $region27: #{spdconv_oct_forward.1} parent=23 // pred_region
        %s215 = smul.u32 8, %s19
        %s216 = ssub.s32 10, %s215
        %p217 = scmp.lt.s32.totalorder %s216, 8
        %s218 = scalar_select %p217, %s216, 8
        %s219 = smul.u32 64, %s218
        %s220 = smul.u32 %s219, 2
        %p221 = scmp.lt.s32.totalorder %s18, 1
        %s222 = scalar_select %p221, %s18, 1
        %p223 = scmp.lt.s32.totalorder %s215, 9
        %s224 = scalar_select %p223, %s215, 9
        %s225 = smul.addr %s224, 2
        %s226 = smul.addr %s222, 20
        %s227 = sadd.s32 %s225, %s226
        %s228 = smul.addr %s227, 4
        %s229 = scalar_lea.vmem %s0, %s228
        %s230 = smul.u32 8, %s19
        %s231 = ssub.s32 10, %s230
        %p232 = scmp.lt.s32.totalorder %s231, 8
        %s233 = scalar_select %p232, %s231, 8
        %s234 = smul.u32 64, %s233
        %s235 = smul.u32 %s234, 2
      $region28: #{spdconv_oct_forward.1} parent=23 // pred_fallthru
        _
      // Predicated region
      $region29: #{spdconv_oct_forward.1} parent=23 // pred_check
        %p236 = pneg %p77
      $region30: #{spdconv_oct_forward.1} parent=23 // pred_check_branch
        %238 = sbr.rel (%p236) target = $region32
      $region31: #{spdconv_oct_forward.1} parent=23 // pred_region
        %s239 = sadd.s32 %s19, 1
        %s240 = smul.u32 %s239, 8
        %p241 = scmp.lt.s32.totalorder %s18, 1
        %s242 = scalar_select %p241, %s18, 1
        %p243 = scmp.lt.s32.totalorder %s240, 9
        %s244 = scalar_select %p243, %s240, 9
        %s245 = smul.addr %s244, 2
        %s246 = smul.addr %s242, 20
        %s247 = sadd.s32 %s245, %s246
        %s248 = smul.addr %s247, 4
        %s249 = scalar_lea.vmem %s1, %s248
        %s250 = sadd.s32 %s19, 1
        %s251 = smul.u32 %s250, 8
      $region32: #{spdconv_oct_forward.1} parent=23 // pred_fallthru
        _
      // Predicated region
      $region33: #{spdconv_oct_forward.1} parent=23 // pred_check
        %p252 = pneg %p111
      $region34: #{spdconv_oct_forward.1} parent=23 // pred_check_branch
        %254 = sbr.rel (%p252) target = $region36
      $region35: #{spdconv_oct_forward.1} parent=23 // pred_region
        %s255 = sadd.s32 %s19, 1
        %s256 = smul.u32 %s255, 8
        %s257 = sadd.s32 %s256, 1
        %p258 = scmp.lt.s32.totalorder %s18, 1
        %s259 = scalar_select %p258, %s18, 1
        %p260 = scmp.lt.s32.totalorder %s257, 9
        %s261 = scalar_select %p260, %s257, 9
        %s262 = smul.addr %s261, 2
        %s263 = smul.addr %s259, 20
        %s264 = sadd.s32 %s262, %s263
        %s265 = smul.addr %s264, 4
        %s266 = scalar_lea.vmem %s2, %s265
        %s267 = sadd.s32 %s19, 1
        %s268 = smul.u32 %s267, 8
        %s269 = sadd.s32 %s268, 1
      $region36: #{spdconv_oct_forward.1} parent=23 // pred_fallthru
        _
    $region24: #{spdconv_oct_forward.1} parent=5 // pred_fallthru
      _
    %p270 = scmp.le.s32.totalorder 1, %s11
    %p271 = scmp.lt.s32.totalorder %s11, 3
    %p272 = pnand %p270, %p271
    %p273 = pneg %p272
    // Predicated region
    $region37: #{spdconv_oct_forward.1} parent=5 // pred_check
      _
    $region38: #{spdconv_oct_forward.1} parent=5 // pred_check_branch
      %275 = sbr.rel (%p272) target = $region40
    $region39: #{spdconv_oct_forward.1} parent=5 // pred_region
      %s276 = ssub.s32 %s11, 1
      %s277 = smul.u32 8, %s21
      %s278 = ssub.s32 10, %s277
      %p279 = scmp.lt.s32.totalorder %s278, 8
      %s280 = scalar_select %p279, %s278, 8
      %s281 = smul.u32 64, %s280
      %s282 = smul.u32 %s281, 2
      %p283 = scmp.lt.s32.totalorder %s20, 1
      %s284 = scalar_select %p283, %s20, 1
      %p285 = scmp.lt.s32.totalorder %s277, 9
      %s286 = scalar_select %p285, %s277, 9
      %s287 = smul.addr %s286, 2
      %s288 = smul.addr %s284, 20
      %s289 = sadd.s32 %s287, %s288
      %s290 = smul.addr %s289, 4
      %s291 = scalar_lea.vmem %s0, %s290
      %p292 = pneg %p51
      %p293 = pneg %p48
      %s294 = sadd.s32 %s21, 1
      %s295 = smul.u32 %s294, 8
      %p296 = scmp.lt.s32.totalorder %s20, 1
      %s297 = scalar_select %p296, %s20, 1
      %p298 = scmp.lt.s32.totalorder %s295, 9
      %s299 = scalar_select %p298, %s295, 9
      %s300 = smul.addr %s299, 2
      %s301 = smul.addr %s297, 20
      %s302 = sadd.s32 %s300, %s301
      %s303 = smul.addr %s302, 4
      %s304 = scalar_lea.vmem %s1, %s303
      %p305 = pneg %p83
      %p306 = pneg %p80
      %s307 = sadd.s32 %s21, 1
      %s308 = smul.u32 %s307, 8
      %s309 = sadd.s32 %s308, 1
      %p310 = scmp.lt.s32.totalorder %s20, 1
      %s311 = scalar_select %p310, %s20, 1
      %p312 = scmp.lt.s32.totalorder %s309, 9
      %s313 = scalar_select %p312, %s309, 9
      %s314 = smul.addr %s313, 2
      %s315 = smul.addr %s311, 20
      %s316 = sadd.s32 %s314, %s315
      %s317 = smul.addr %s316, 4
      %s318 = scalar_lea.vmem %s2, %s317
      %p319 = pneg %p117
      %p320 = pneg %p114
      %p321 = pneg %p138
      %p322 = pneg %p135
      %p323 = pneg %p159
      %p324 = pneg %p156
      %p325 = pneg %p187
      %p326 = pneg %p184
      %s327 = smul.u32 8, %s21
      %p328 = scmp.lt.s32.totalorder %s20, 1
      %s329 = scalar_select %p328, %s20, 1
      %p330 = scmp.lt.s32.totalorder %s327, 7
      %s331 = scalar_select %p330, %s327, 7
      %s332 = smul.addr %s329, 8
      %s333 = sadd.s32 %s331, %s332
      %s334 = smul.addr %s333, 4
      %s335 = scalar_lea.vmem %s5, %s334
      %s336 = smul.u32 8, %s21
      %s337 = ssub.s32 10, %s336
      %p338 = scmp.lt.s32.totalorder %s337, 8
      %s339 = scalar_select %p338, %s337, 8
      %s340 = smul.u32 64, %s339
      %s341 = smul.u32 %s340, 2
      %p342 = scmp.lt.s32.totalorder %s20, 1
      %s343 = scalar_select %p342, %s20, 1
      %p344 = scmp.lt.s32.totalorder %s336, 9
      %s345 = scalar_select %p344, %s336, 9
      %s346 = smul.addr %s345, 2
      %s347 = smul.addr %s343, 20
      %s348 = sadd.s32 %s346, %s347
      %s349 = smul.addr %s348, 4
      %s350 = scalar_lea.vmem %s0, %s349
      %s351 = smul.u32 8, %s21
      %s352 = ssub.s32 10, %s351
      %p353 = scmp.lt.s32.totalorder %s352, 8
      %s354 = scalar_select %p353, %s352, 8
      %s355 = smul.u32 64, %s354
      %s356 = smul.u32 %s355, 2
      %s357 = sadd.s32 %s21, 1
      %s358 = smul.u32 %s357, 8
      %p359 = scmp.lt.s32.totalorder %s20, 1
      %s360 = scalar_select %p359, %s20, 1
      %p361 = scmp.lt.s32.totalorder %s358, 9
      %s362 = scalar_select %p361, %s358, 9
      %s363 = smul.addr %s362, 2
      %s364 = smul.addr %s360, 20
      %s365 = sadd.s32 %s363, %s364
      %s366 = smul.addr %s365, 4
      %s367 = scalar_lea.vmem %s1, %s366
      %s368 = sadd.s32 %s21, 1
      %s369 = smul.u32 %s368, 8
      %s370 = sadd.s32 %s21, 1
      %s371 = smul.u32 %s370, 8
      %s372 = sadd.s32 %s371, 1
      %p373 = scmp.lt.s32.totalorder %s20, 1
      %s374 = scalar_select %p373, %s20, 1
      %p375 = scmp.lt.s32.totalorder %s372, 9
      %s376 = scalar_select %p375, %s372, 9
      %s377 = smul.addr %s376, 2
      %s378 = smul.addr %s374, 20
      %s379 = sadd.s32 %s377, %s378
      %s380 = smul.addr %s379, 4
      %s381 = scalar_lea.vmem %s2, %s380
      %s382 = sadd.s32 %s21, 1
      %s383 = smul.u32 %s382, 8
      %s384 = sadd.s32 %s383, 1
      %s385 = smul.u32 8, %s21
      %p386 = scmp.lt.s32.totalorder %s20, 1
      %s387 = scalar_select %p386, %s20, 1
      %p388 = scmp.lt.s32.totalorder %s385, 7
      %s389 = scalar_select %p388, %s385, 7
      %s390 = smul.addr %s387, 8
      %s391 = sadd.s32 %s389, %s390
      %s392 = smul.addr %s391, 4
      %s393 = scalar_lea.vmem %s5, %s392
      %s394 = smul.u32 8, %s21
      %v396 = vld [vmem:[%s350] sm:$0xf]
      %v397 = vld [vmem:[%s350 + $0x8] sm:$0xf]
      %v398 = vld [vmem:[%s350 + $0x10] sm:$0xf]
      %v399 = vld [vmem:[%s350 + $0x18] sm:$0xf]
      %v400 = vld [vmem:[%s350 + $0x20] sm:$0xf]
      %v401 = vld [vmem:[%s350 + $0x28] sm:$0xf]
      %v402 = vld [vmem:[%s350 + $0x30] sm:$0xf]
      %v403 = vld [vmem:[%s350 + $0x38] sm:$0xf]
      %vm404 = vcmask 125952
      %405 = vst.msk [vmem:[#allocation2] sm:$0xf] %vm404, %v396
      %406 = vst.msk [vmem:[#allocation2 + $0x4] sm:$0xf] %vm404, %v397
      %407 = vst.msk [vmem:[#allocation2 + $0x8] sm:$0xf] %vm404, %v398
      %408 = vst.msk [vmem:[#allocation2 + $0xc] sm:$0xf] %vm404, %v399
      %409 = vst.msk [vmem:[#allocation2 + $0x10] sm:$0xf] %vm404, %v400
      %410 = vst.msk [vmem:[#allocation2 + $0x14] sm:$0xf] %vm404, %v401
      %411 = vst.msk [vmem:[#allocation2 + $0x18] sm:$0xf] %vm404, %v402
      %412 = vst.msk [vmem:[#allocation2 + $0x1c] sm:$0xf] %vm404, %v403
      %v413 = vld [vmem:[%s350] sm:$0xf]
      %v414 = vld [vmem:[%s350 + $0x4] sm:$0x1]
      %v415 = vld [vmem:[%s350 + $0x8] sm:$0xf]
      %v416 = vld [vmem:[%s350 + $0xc] sm:$0x1]
      %v417 = vld [vmem:[%s350 + $0x10] sm:$0xf]
      %v418 = vld [vmem:[%s350 + $0x14] sm:$0x1]
      %v419 = vld [vmem:[%s350 + $0x18] sm:$0xf]
      %v420 = vld [vmem:[%s350 + $0x1c] sm:$0x1]
      %v421 = vld [vmem:[%s350 + $0x20] sm:$0xf]
      %v422 = vld [vmem:[%s350 + $0x24] sm:$0x1]
      %v423 = vld [vmem:[%s350 + $0x28] sm:$0xf]
      %v424 = vld [vmem:[%s350 + $0x2c] sm:$0x1]
      %v425 = vld [vmem:[%s350 + $0x30] sm:$0xf]
      %v426 = vld [vmem:[%s350 + $0x34] sm:$0x1]
      %v427 = vld [vmem:[%s350 + $0x38] sm:$0xf]
      %v428 = vld [vmem:[%s350 + $0x3c] sm:$0x1]
      %vm429 = vsmask.f32 3328
      %vm430 = vsmask.f32 7440
      %vm431 = vmor %vm429, %vm430
      %v433 = vshrl.u32 %v413, 16
      %v435 = vrot.slane %v433, 4
      %v436 = vshll.u32 %v413, 16
      %v438 = vrot.slane %v436, 5
      %v439 = vor.u32 %v435, %v438
      %v440 = vrot.slane %v439, 4
      %v442 = vshll.u32 %v414, 16
      %v444 = vrot.slane %v442, 5
      %v445 = vsel %vm431, %v440, %v444
      %v447 = vshrl.u32 %v415, 16
      %v449 = vrot.slane %v447, 4
      %v450 = vshll.u32 %v415, 16
      %v452 = vrot.slane %v450, 5
      %v453 = vor.u32 %v449, %v452
      %v454 = vrot.slane %v453, 4
      %v456 = vshll.u32 %v416, 16
      %v458 = vrot.slane %v456, 5
      %v459 = vsel %vm431, %v454, %v458
      %v461 = vshrl.u32 %v417, 16
      %v463 = vrot.slane %v461, 4
      %v464 = vshll.u32 %v417, 16
      %v466 = vrot.slane %v464, 5
      %v467 = vor.u32 %v463, %v466
      %v468 = vrot.slane %v467, 4
      %v470 = vshll.u32 %v418, 16
      %v472 = vrot.slane %v470, 5
      %v473 = vsel %vm431, %v468, %v472
      %v475 = vshrl.u32 %v419, 16
      %v477 = vrot.slane %v475, 4
      %v478 = vshll.u32 %v419, 16
      %v480 = vrot.slane %v478, 5
      %v481 = vor.u32 %v477, %v480
      %v482 = vrot.slane %v481, 4
      %v484 = vshll.u32 %v420, 16
      %v486 = vrot.slane %v484, 5
      %v487 = vsel %vm431, %v482, %v486
      %v489 = vshrl.u32 %v421, 16
      %v491 = vrot.slane %v489, 4
      %v492 = vshll.u32 %v421, 16
      %v494 = vrot.slane %v492, 5
      %v495 = vor.u32 %v491, %v494
      %v496 = vrot.slane %v495, 4
      %v498 = vshll.u32 %v422, 16
      %v500 = vrot.slane %v498, 5
      %v501 = vsel %vm431, %v496, %v500
      %v503 = vshrl.u32 %v423, 16
      %v505 = vrot.slane %v503, 4
      %v506 = vshll.u32 %v423, 16
      %v508 = vrot.slane %v506, 5
      %v509 = vor.u32 %v505, %v508
      %v510 = vrot.slane %v509, 4
      %v512 = vshll.u32 %v424, 16
      %v514 = vrot.slane %v512, 5
      %v515 = vsel %vm431, %v510, %v514
      %v517 = vshrl.u32 %v425, 16
      %v519 = vrot.slane %v517, 4
      %v520 = vshll.u32 %v425, 16
      %v522 = vrot.slane %v520, 5
      %v523 = vor.u32 %v519, %v522
      %v524 = vrot.slane %v523, 4
      %v526 = vshll.u32 %v426, 16
      %v528 = vrot.slane %v526, 5
      %v529 = vsel %vm431, %v524, %v528
      %v531 = vshrl.u32 %v427, 16
      %v533 = vrot.slane %v531, 4
      %v534 = vshll.u32 %v427, 16
      %v536 = vrot.slane %v534, 5
      %v537 = vor.u32 %v533, %v536
      %v538 = vrot.slane %v537, 4
      %v540 = vshll.u32 %v428, 16
      %v542 = vrot.slane %v540, 5
      %v543 = vsel %vm431, %v538, %v542
      %544 = vrot.lane.b32.xlu0 %v445, 16
      %v545 = vpop.permute.xlu0 %544
      %546 = vrot.lane.b32.xlu0 %v459, 16
      %v547 = vpop.permute.xlu0 %546
      %548 = vrot.lane.b32.xlu0 %v473, 16
      %v549 = vpop.permute.xlu0 %548
      %550 = vrot.lane.b32.xlu0 %v487, 16
      %v551 = vpop.permute.xlu0 %550
      %552 = vrot.lane.b32.xlu0 %v501, 16
      %v553 = vpop.permute.xlu0 %552
      %554 = vrot.lane.b32.xlu0 %v515, 16
      %v555 = vpop.permute.xlu0 %554
      %556 = vrot.lane.b32.xlu0 %v529, 16
      %v557 = vpop.permute.xlu0 %556
      %558 = vrot.lane.b32.xlu0 %v543, 16
      %v559 = vpop.permute.xlu0 %558
      %vm568 = vcmask 257152
      %569 = vst.msk [vmem:[#allocation2] sm:$0xf] %vm568, %v545
      %570 = vst.msk [vmem:[#allocation2 + $0x4] sm:$0xf] %vm568, %v547
      %571 = vst.msk [vmem:[#allocation2 + $0x8] sm:$0xf] %vm568, %v549
      %572 = vst.msk [vmem:[#allocation2 + $0xc] sm:$0xf] %vm568, %v551
      %573 = vst.msk [vmem:[#allocation2 + $0x10] sm:$0xf] %vm568, %v553
      %574 = vst.msk [vmem:[#allocation2 + $0x14] sm:$0xf] %vm568, %v555
      %575 = vst.msk [vmem:[#allocation2 + $0x18] sm:$0xf] %vm568, %v557
      %576 = vst.msk [vmem:[#allocation2 + $0x1c] sm:$0xf] %vm568, %v559
      %v577 = vld [vmem:[%s350] sm:$0xe]
      %v578 = vld [vmem:[%s350 + $0x4] sm:$0x1]
      %v579 = vld [vmem:[%s350 + $0x8] sm:$0xe]
      %v580 = vld [vmem:[%s350 + $0xc] sm:$0x1]
      %v581 = vld [vmem:[%s350 + $0x10] sm:$0xe]
      %v582 = vld [vmem:[%s350 + $0x14] sm:$0x1]
      %v583 = vld [vmem:[%s350 + $0x18] sm:$0xe]
      %v584 = vld [vmem:[%s350 + $0x1c] sm:$0x1]
      %v585 = vld [vmem:[%s350 + $0x20] sm:$0xe]
      %v586 = vld [vmem:[%s350 + $0x24] sm:$0x1]
      %v587 = vld [vmem:[%s350 + $0x28] sm:$0xe]
      %v588 = vld [vmem:[%s350 + $0x2c] sm:$0x1]
      %v589 = vld [vmem:[%s350 + $0x30] sm:$0xe]
      %v590 = vld [vmem:[%s350 + $0x34] sm:$0x1]
      %v591 = vld [vmem:[%s350 + $0x38] sm:$0xe]
      %v592 = vld [vmem:[%s350 + $0x3c] sm:$0x1]
      %vm609 = vcmask 1042432
      %vm610 = vcmask 1046532
      %vm611 = vmor %vm609, %vm610
      %v612 = vrot.slane %v577, 5
      %v613 = vrot.slane %v612, 4
      %v614 = vrot.slane %v578, 5
      %v615 = vsel %vm611, %v613, %v614
      %v616 = vrot.slane %v579, 5
      %v617 = vrot.slane %v616, 4
      %v618 = vrot.slane %v580, 5
      %v619 = vsel %vm611, %v617, %v618
      %v620 = vrot.slane %v581, 5
      %v621 = vrot.slane %v620, 4
      %v622 = vrot.slane %v582, 5
      %v623 = vsel %vm611, %v621, %v622
      %v624 = vrot.slane %v583, 5
      %v625 = vrot.slane %v624, 4
      %v626 = vrot.slane %v584, 5
      %v627 = vsel %vm611, %v625, %v626
      %v628 = vrot.slane %v585, 5
      %v629 = vrot.slane %v628, 4
      %v630 = vrot.slane %v586, 5
      %v631 = vsel %vm611, %v629, %v630
      %v632 = vrot.slane %v587, 5
      %v633 = vrot.slane %v632, 4
      %v634 = vrot.slane %v588, 5
      %v635 = vsel %vm611, %v633, %v634
      %v636 = vrot.slane %v589, 5
      %v637 = vrot.slane %v636, 4
      %v638 = vrot.slane %v590, 5
      %v639 = vsel %vm611, %v637, %v638
      %v640 = vrot.slane %v591, 5
      %v641 = vrot.slane %v640, 4
      %v642 = vrot.slane %v592, 5
      %v643 = vsel %vm611, %v641, %v642
      %644 = vrot.lane.b32.xlu0 %v615, 32
      %v645 = vpop.permute.xlu0 %644
      %646 = vrot.lane.b32.xlu0 %v619, 32
      %v647 = vpop.permute.xlu0 %646
      %648 = vrot.lane.b32.xlu0 %v623, 32
      %v649 = vpop.permute.xlu0 %648
      %650 = vrot.lane.b32.xlu0 %v627, 32
      %v651 = vpop.permute.xlu0 %650
      %652 = vrot.lane.b32.xlu0 %v631, 32
      %v653 = vpop.permute.xlu0 %652
      %654 = vrot.lane.b32.xlu0 %v635, 32
      %v655 = vpop.permute.xlu0 %654
      %656 = vrot.lane.b32.xlu0 %v639, 32
      %v657 = vpop.permute.xlu0 %656
      %658 = vrot.lane.b32.xlu0 %v643, 32
      %v659 = vpop.permute.xlu0 %658
      %vm668 = vcmask 388352
      %669 = vst.msk [vmem:[#allocation2] sm:$0xf] %vm668, %v645
      %670 = vst.msk [vmem:[#allocation2 + $0x4] sm:$0xf] %vm668, %v647
      %671 = vst.msk [vmem:[#allocation2 + $0x8] sm:$0xf] %vm668, %v649
      %672 = vst.msk [vmem:[#allocation2 + $0xc] sm:$0xf] %vm668, %v651
      %673 = vst.msk [vmem:[#allocation2 + $0x10] sm:$0xf] %vm668, %v653
      %674 = vst.msk [vmem:[#allocation2 + $0x14] sm:$0xf] %vm668, %v655
      %675 = vst.msk [vmem:[#allocation2 + $0x18] sm:$0xf] %vm668, %v657
      %676 = vst.msk [vmem:[#allocation2 + $0x1c] sm:$0xf] %vm668, %v659
      %v677 = vld [vmem:[#allocation2] sm:$0xf]
      %v678 = vld [vmem:[#allocation2 + $0x4] sm:$0xf]
      %v679 = vld [vmem:[#allocation2 + $0x8] sm:$0xf]
      %v680 = vld [vmem:[#allocation2 + $0xc] sm:$0xf]
      %v681 = vld [vmem:[#allocation2 + $0x10] sm:$0xf]
      %v682 = vld [vmem:[#allocation2 + $0x14] sm:$0xf]
      %v683 = vld [vmem:[#allocation2 + $0x18] sm:$0xf]
      %v684 = vld [vmem:[#allocation2 + $0x1c] sm:$0xf]
      %v685 = vld [vmem:[%s3] sm:$0xf]
      %v686 = vld [vmem:[%s3 + $0x4] sm:$0xf]
      %v687 = vld [vmem:[%s3 + $0x8] sm:$0xf]
      %v688 = vld [vmem:[%s3 + $0xc] sm:$0xf]
      %v689 = vld [vmem:[%s3 + $0x10] sm:$0xf]
      %v690 = vld [vmem:[%s3 + $0x14] sm:$0xf]
      %s691 = scalar_lea.vmem %s350, 8
      %v692 = vld [vmem:[%s691] sm:$0xf]
      %v693 = vld [vmem:[%s691 + $0x8] sm:$0xf]
      %v694 = vld [vmem:[%s691 + $0x10] sm:$0xf]
      %v695 = vld [vmem:[%s691 + $0x18] sm:$0xf]
      %v696 = vld [vmem:[%s691 + $0x20] sm:$0xf]
      %v697 = vld [vmem:[%s691 + $0x28] sm:$0xf]
      %v698 = vld [vmem:[%s691 + $0x30] sm:$0xf]
      %699 = vst.msk [vmem:[#allocation3] sm:$0xf] %vm404, %v692
      %700 = vst.msk [vmem:[#allocation3 + $0x4] sm:$0xf] %vm404, %v693
      %701 = vst.msk [vmem:[#allocation3 + $0x8] sm:$0xf] %vm404, %v694
      %702 = vst.msk [vmem:[#allocation3 + $0xc] sm:$0xf] %vm404, %v695
      %703 = vst.msk [vmem:[#allocation3 + $0x10] sm:$0xf] %vm404, %v696
      %704 = vst.msk [vmem:[#allocation3 + $0x14] sm:$0xf] %vm404, %v697
      %705 = vst.msk [vmem:[#allocation3 + $0x18] sm:$0xf] %vm404, %v698
      %v706 = vld [vmem:[%s367] sm:$0xf]
      %s707 = scalar_lea.vmem [#allocation3], 28
      %708 = vst.msk [vmem:[%s707] sm:$0xf] %vm404, %v706
      %v709 = vld [vmem:[%s691] sm:$0xf]
      %v710 = vld [vmem:[%s691 + $0x4] sm:$0x1]
      %v711 = vld [vmem:[%s691 + $0x8] sm:$0xf]
      %v712 = vld [vmem:[%s691 + $0xc] sm:$0x1]
      %v713 = vld [vmem:[%s691 + $0x10] sm:$0xf]
      %v714 = vld [vmem:[%s691 + $0x14] sm:$0x1]
      %v715 = vld [vmem:[%s691 + $0x18] sm:$0xf]
      %v716 = vld [vmem:[%s691 + $0x1c] sm:$0x1]
      %v717 = vld [vmem:[%s691 + $0x20] sm:$0xf]
      %v718 = vld [vmem:[%s691 + $0x24] sm:$0x1]
      %v719 = vld [vmem:[%s691 + $0x28] sm:$0xf]
      %v720 = vld [vmem:[%s691 + $0x2c] sm:$0x1]
      %v721 = vld [vmem:[%s691 + $0x30] sm:$0xf]
      %v722 = vld [vmem:[%s691 + $0x34] sm:$0x1]
      %v724 = vshrl.u32 %v709, 16
      %v726 = vrot.slane %v724, 4
      %v727 = vshll.u32 %v709, 16
      %v729 = vrot.slane %v727, 5
      %v730 = vor.u32 %v726, %v729
      %v731 = vrot.slane %v730, 4
      %v733 = vshll.u32 %v710, 16
      %v735 = vrot.slane %v733, 5
      %v736 = vsel %vm431, %v731, %v735
      %v738 = vshrl.u32 %v711, 16
      %v740 = vrot.slane %v738, 4
      %v741 = vshll.u32 %v711, 16
      %v743 = vrot.slane %v741, 5
      %v744 = vor.u32 %v740, %v743
      %v745 = vrot.slane %v744, 4
      %v747 = vshll.u32 %v712, 16
      %v749 = vrot.slane %v747, 5
      %v750 = vsel %vm431, %v745, %v749
      %v752 = vshrl.u32 %v713, 16
      %v754 = vrot.slane %v752, 4
      %v755 = vshll.u32 %v713, 16
      %v757 = vrot.slane %v755, 5
      %v758 = vor.u32 %v754, %v757
      %v759 = vrot.slane %v758, 4
      %v761 = vshll.u32 %v714, 16
      %v763 = vrot.slane %v761, 5
      %v764 = vsel %vm431, %v759, %v763
      %v766 = vshrl.u32 %v715, 16
      %v768 = vrot.slane %v766, 4
      %v769 = vshll.u32 %v715, 16
      %v771 = vrot.slane %v769, 5
      %v772 = vor.u32 %v768, %v771
      %v773 = vrot.slane %v772, 4
      %v775 = vshll.u32 %v716, 16
      %v777 = vrot.slane %v775, 5
      %v778 = vsel %vm431, %v773, %v777
      %v780 = vshrl.u32 %v717, 16
      %v782 = vrot.slane %v780, 4
      %v783 = vshll.u32 %v717, 16
      %v785 = vrot.slane %v783, 5
      %v786 = vor.u32 %v782, %v785
      %v787 = vrot.slane %v786, 4
      %v789 = vshll.u32 %v718, 16
      %v791 = vrot.slane %v789, 5
      %v792 = vsel %vm431, %v787, %v791
      %v794 = vshrl.u32 %v719, 16
      %v796 = vrot.slane %v794, 4
      %v797 = vshll.u32 %v719, 16
      %v799 = vrot.slane %v797, 5
      %v800 = vor.u32 %v796, %v799
      %v801 = vrot.slane %v800, 4
      %v803 = vshll.u32 %v720, 16
      %v805 = vrot.slane %v803, 5
      %v806 = vsel %vm431, %v801, %v805
      %v808 = vshrl.u32 %v721, 16
      %v810 = vrot.slane %v808, 4
      %v811 = vshll.u32 %v721, 16
      %v813 = vrot.slane %v811, 5
      %v814 = vor.u32 %v810, %v813
      %v815 = vrot.slane %v814, 4
      %v817 = vshll.u32 %v722, 16
      %v819 = vrot.slane %v817, 5
      %v820 = vsel %vm431, %v815, %v819
      %821 = vrot.lane.b32.xlu0 %v736, 16
      %v822 = vpop.permute.xlu0 %821
      %823 = vrot.lane.b32.xlu0 %v750, 16
      %v824 = vpop.permute.xlu0 %823
      %825 = vrot.lane.b32.xlu0 %v764, 16
      %v826 = vpop.permute.xlu0 %825
      %827 = vrot.lane.b32.xlu0 %v778, 16
      %v828 = vpop.permute.xlu0 %827
      %829 = vrot.lane.b32.xlu0 %v792, 16
      %v830 = vpop.permute.xlu0 %829
      %831 = vrot.lane.b32.xlu0 %v806, 16
      %v832 = vpop.permute.xlu0 %831
      %833 = vrot.lane.b32.xlu0 %v820, 16
      %v834 = vpop.permute.xlu0 %833
      %842 = vst.msk [vmem:[#allocation3] sm:$0xf] %vm568, %v822
      %843 = vst.msk [vmem:[#allocation3 + $0x4] sm:$0xf] %vm568, %v824
      %844 = vst.msk [vmem:[#allocation3 + $0x8] sm:$0xf] %vm568, %v826
      %845 = vst.msk [vmem:[#allocation3 + $0xc] sm:$0xf] %vm568, %v828
      %846 = vst.msk [vmem:[#allocation3 + $0x10] sm:$0xf] %vm568, %v830
      %847 = vst.msk [vmem:[#allocation3 + $0x14] sm:$0xf] %vm568, %v832
      %848 = vst.msk [vmem:[#allocation3 + $0x18] sm:$0xf] %vm568, %v834
      %v849 = vld [vmem:[%s367] sm:$0xf]
      %v850 = vld [vmem:[%s367 + $0x4] sm:$0x1]
      %v852 = vshrl.u32 %v849, 16
      %v854 = vrot.slane %v852, 4
      %v855 = vshll.u32 %v849, 16
      %v857 = vrot.slane %v855, 5
      %v858 = vor.u32 %v854, %v857
      %v859 = vrot.slane %v858, 4
      %v861 = vshll.u32 %v850, 16
      %v863 = vrot.slane %v861, 5
      %v864 = vsel %vm431, %v859, %v863
      %865 = vrot.lane.b32.xlu0 %v864, 16
      %v866 = vpop.permute.xlu0 %865
      %868 = vst.msk [vmem:[%s707] sm:$0xf] %vm568, %v866
      %v869 = vld [vmem:[%s691] sm:$0xe]
      %v870 = vld [vmem:[%s691 + $0x4] sm:$0x1]
      %v871 = vld [vmem:[%s691 + $0x8] sm:$0xe]
      %v872 = vld [vmem:[%s691 + $0xc] sm:$0x1]
      %v873 = vld [vmem:[%s691 + $0x10] sm:$0xe]
      %v874 = vld [vmem:[%s691 + $0x14] sm:$0x1]
      %v875 = vld [vmem:[%s691 + $0x18] sm:$0xe]
      %v876 = vld [vmem:[%s691 + $0x1c] sm:$0x1]
      %v877 = vld [vmem:[%s691 + $0x20] sm:$0xe]
      %v878 = vld [vmem:[%s691 + $0x24] sm:$0x1]
      %v879 = vld [vmem:[%s691 + $0x28] sm:$0xe]
      %v880 = vld [vmem:[%s691 + $0x2c] sm:$0x1]
      %v881 = vld [vmem:[%s691 + $0x30] sm:$0xe]
      %v882 = vld [vmem:[%s691 + $0x34] sm:$0x1]
      %v897 = vrot.slane %v869, 5
      %v898 = vrot.slane %v897, 4
      %v899 = vrot.slane %v870, 5
      %v900 = vsel %vm611, %v898, %v899
      %v901 = vrot.slane %v871, 5
      %v902 = vrot.slane %v901, 4
      %v903 = vrot.slane %v872, 5
      %v904 = vsel %vm611, %v902, %v903
      %v905 = vrot.slane %v873, 5
      %v906 = vrot.slane %v905, 4
      %v907 = vrot.slane %v874, 5
      %v908 = vsel %vm611, %v906, %v907
      %v909 = vrot.slane %v875, 5
      %v910 = vrot.slane %v909, 4
      %v911 = vrot.slane %v876, 5
      %v912 = vsel %vm611, %v910, %v911
      %v913 = vrot.slane %v877, 5
      %v914 = vrot.slane %v913, 4
      %v915 = vrot.slane %v878, 5
      %v916 = vsel %vm611, %v914, %v915
      %v917 = vrot.slane %v879, 5
      %v918 = vrot.slane %v917, 4
      %v919 = vrot.slane %v880, 5
      %v920 = vsel %vm611, %v918, %v919
      %v921 = vrot.slane %v881, 5
      %v922 = vrot.slane %v921, 4
      %v923 = vrot.slane %v882, 5
      %v924 = vsel %vm611, %v922, %v923
      %925 = vrot.lane.b32.xlu0 %v900, 32
      %v926 = vpop.permute.xlu0 %925
      %927 = vrot.lane.b32.xlu0 %v904, 32
      %v928 = vpop.permute.xlu0 %927
      %929 = vrot.lane.b32.xlu0 %v908, 32
      %v930 = vpop.permute.xlu0 %929
      %931 = vrot.lane.b32.xlu0 %v912, 32
      %v932 = vpop.permute.xlu0 %931
      %933 = vrot.lane.b32.xlu0 %v916, 32
      %v934 = vpop.permute.xlu0 %933
      %935 = vrot.lane.b32.xlu0 %v920, 32
      %v936 = vpop.permute.xlu0 %935
      %937 = vrot.lane.b32.xlu0 %v924, 32
      %v938 = vpop.permute.xlu0 %937
      %946 = vst.msk [vmem:[#allocation3] sm:$0xf] %vm668, %v926
      %947 = vst.msk [vmem:[#allocation3 + $0x4] sm:$0xf] %vm668, %v928
      %948 = vst.msk [vmem:[#allocation3 + $0x8] sm:$0xf] %vm668, %v930
      %949 = vst.msk [vmem:[#allocation3 + $0xc] sm:$0xf] %vm668, %v932
      %950 = vst.msk [vmem:[#allocation3 + $0x10] sm:$0xf] %vm668, %v934
      %951 = vst.msk [vmem:[#allocation3 + $0x14] sm:$0xf] %vm668, %v936
      %952 = vst.msk [vmem:[#allocation3 + $0x18] sm:$0xf] %vm668, %v938
      %v953 = vld [vmem:[%s367] sm:$0xe]
      %v954 = vld [vmem:[%s367 + $0x4] sm:$0x1]
      %v957 = vrot.slane %v953, 5
      %v958 = vrot.slane %v957, 4
      %v959 = vrot.slane %v954, 5
      %v960 = vsel %vm611, %v958, %v959
      %961 = vrot.lane.b32.xlu0 %v960, 32
      %v962 = vpop.permute.xlu0 %961
      %964 = vst.msk [vmem:[%s707] sm:$0xf] %vm668, %v962
      %v965 = vld [vmem:[#allocation3] sm:$0xf]
      %v966 = vld [vmem:[#allocation3 + $0x4] sm:$0xf]
      %v967 = vld [vmem:[#allocation3 + $0x8] sm:$0xf]
      %v968 = vld [vmem:[#allocation3 + $0xc] sm:$0xf]
      %v969 = vld [vmem:[#allocation3 + $0x10] sm:$0xf]
      %v970 = vld [vmem:[#allocation3 + $0x14] sm:$0xf]
      %v971 = vld [vmem:[#allocation3 + $0x18] sm:$0xf]
      %v972 = vld [vmem:[#allocation3 + $0x1c] sm:$0xf]
      %v973 = vld [vmem:[%s3 + $0x18] sm:$0xf]
      %v974 = vld [vmem:[%s3 + $0x1c] sm:$0xf]
      %v975 = vld [vmem:[%s3 + $0x20] sm:$0xf]
      %v976 = vld [vmem:[%s3 + $0x24] sm:$0xf]
      %v977 = vld [vmem:[%s3 + $0x28] sm:$0xf]
      %v978 = vld [vmem:[%s3 + $0x2c] sm:$0xf]
      %v987 = vunpack.c.l.b16 %v965
      %v988 = vunpack.c.l.b16 %v966
      %v989 = vunpack.c.l.b16 %v967
      %v990 = vunpack.c.l.b16 %v968
      %v991 = vunpack.c.l.b16 %v969
      %v992 = vunpack.c.l.b16 %v970
      %v993 = vunpack.c.l.b16 %v971
      %v994 = vunpack.c.l.b16 %v972
      %v995 = vpack.c.b16 %v988, %v987
      %v996 = vpack.c.b16 %v990, %v989
      %v997 = vpack.c.b16 %v992, %v991
      %v998 = vpack.c.b16 %v994, %v993
      %v1005 = vunpack.c.l.b16 %v973
      %v1006 = vunpack.c.l.b16 %v974
      %v1007 = vunpack.c.l.b16 %v975
      %v1008 = vunpack.c.l.b16 %v976
      %v1009 = vunpack.c.l.b16 %v977
      %v1010 = vunpack.c.l.b16 %v978
      %v1011 = vpack.c.b16 %v1006, %v1005
      %v1012 = vpack.c.b16 %v1008, %v1007
      %v1013 = vpack.c.b16 %v1010, %v1009
      %vm1017 = vcmask 392192
      %v1019 = vsel %vm1017, %v995, 0
      %v1022 = vsel %vm1017, %v996, 0
      %v1025 = vsel %vm1017, %v997, 0
      %v1028 = vsel %vm1017, %v998, 0
      %1030 = vmatprep.subr.bf16.mxu0 0
      %1031 = vmatpush1.bf16.msra.mxu0 0
      %1032 = vmatprep.subr.bf16.mxu0 0
      %1033 = vmatpush1.bf16.msra.mxu0 0
      %1034 = vmatprep.subr.bf16.mxu0 0
      %1035 = vmatpush1.bf16.msra.mxu0 0
      %1036 = vmatprep.subr.bf16.mxu0 0
      %1037 = vmatpush1.bf16.msra.mxu0 0
      %1038 = vmatprep.subr.bf16.mxu0 0
      %1039 = vmatpush1.bf16.msra.mxu0 0
      %1040 = vmatprep.subr.bf16.mxu0 0
      %1041 = vmatpush1.bf16.msra.mxu0 %v1013
      %1042 = vmatprep.subr.bf16.mxu0 0
      %1043 = vmatpush1.bf16.msra.mxu0 %v1012
      %1044 = vmatprep.subr.bf16.mxu0 0
      %1045 = vmatpush1.bf16.msra.mxu0 %v1011
      %1046 = vmatprep.subr.bf16.mxu0 0
      %1047 = vmatpush2.bf16.msra.mxu0 0
      %1048 = vmatprep.subr.bf16.mxu0 0
      %1049 = vmatpush2.bf16.msra.mxu0 0
      %1050 = vmatprep.subr.bf16.mxu0 0
      %1051 = vmatpush2.bf16.msra.mxu0 0
      %1052 = vmatprep.subr.bf16.mxu0 0
      %1053 = vmatpush2.bf16.msra.mxu0 0
      %1054 = vmatprep.subr.bf16.mxu0 0
      %1055 = vmatpush2.bf16.msra.mxu0 0
      %1056 = vmatprep.subr.bf16.mxu0 0
      %1057 = vmatpush2.bf16.msra.mxu0 0
      %1058 = vmatprep.subr.bf16.mxu0 0
      %1059 = vmatpush2.bf16.msra.mxu0 0
      %1060 = vmatprep.subr.bf16.mxu0 0
      %1061 = vmatpush2.bf16.msra.mxu0 0
      %1062 = vmatprep.mubr.bf16.mxu0 0
      %1063 = vmatmul.mubr.bf16.gmra.mxu0 %v1019
      %v1064 = vpop.f32.mrf.mxu0
      %v1065 = vadd.f32 0.0, %v1064
      %v1066 = vpop.f32.mrf.mxu0
      %v1067 = vpop.f32.mrf.mxu0
      %v1068 = vadd.f32 0.0, %v1067
      %v1069 = vpop.f32.mrf.mxu0
      %1070 = vmatprep.mubr.bf16.mxu0 0
      %1071 = vmatmul.mubr.bf16.gmra.mxu0 %v1022
      %v1072 = vpop.f32.mrf.mxu0
      %v1073 = vadd.f32 0.0, %v1072
      %v1074 = vpop.f32.mrf.mxu0
      %v1075 = vpop.f32.mrf.mxu0
      %v1076 = vadd.f32 0.0, %v1075
      %v1077 = vpop.f32.mrf.mxu0
      %1078 = vmatprep.mubr.bf16.mxu0 0
      %1079 = vmatmul.mubr.bf16.gmra.mxu0 %v1025
      %v1080 = vpop.f32.mrf.mxu0
      %v1081 = vadd.f32 0.0, %v1080
      %v1082 = vpop.f32.mrf.mxu0
      %v1083 = vpop.f32.mrf.mxu0
      %v1084 = vadd.f32 0.0, %v1083
      %v1085 = vpop.f32.mrf.mxu0
      %1086 = vmatprep.mubr.bf16.mxu0 0
      %1087 = vmatmul.mubr.bf16.gmra.mxu0 %v1028
      %v1088 = vpop.f32.mrf.mxu0
      %v1089 = vadd.f32 0.0, %v1088
      %v1090 = vpop.f32.mrf.mxu0
      %v1091 = vpop.f32.mrf.mxu0
      %v1092 = vadd.f32 0.0, %v1091
      %v1093 = vpop.f32.mrf.mxu0
      %1094 = vdwg.mxu0
      %v1103 = vunpack.c.l.b16 %v677
      %v1104 = vunpack.c.l.b16 %v678
      %v1105 = vunpack.c.l.b16 %v679
      %v1106 = vunpack.c.l.b16 %v680
      %v1107 = vunpack.c.l.b16 %v681
      %v1108 = vunpack.c.l.b16 %v682
      %v1109 = vunpack.c.l.b16 %v683
      %v1110 = vunpack.c.l.b16 %v684
      %v1111 = vpack.c.b16 %v1104, %v1103
      %v1112 = vpack.c.b16 %v1106, %v1105
      %v1113 = vpack.c.b16 %v1108, %v1107
      %v1114 = vpack.c.b16 %v1110, %v1109
      %v1121 = vunpack.c.l.b16 %v685
      %v1122 = vunpack.c.l.b16 %v686
      %v1123 = vunpack.c.l.b16 %v687
      %v1124 = vunpack.c.l.b16 %v688
      %v1125 = vunpack.c.l.b16 %v689
      %v1126 = vunpack.c.l.b16 %v690
      %v1127 = vpack.c.b16 %v1122, %v1121
      %v1128 = vpack.c.b16 %v1124, %v1123
      %v1129 = vpack.c.b16 %v1126, %v1125
      %v1134 = vsel %vm1017, %v1111, 0
      %v1137 = vsel %vm1017, %v1112, 0
      %v1140 = vsel %vm1017, %v1113, 0
      %v1143 = vsel %vm1017, %v1114, 0
      %1145 = vmatprep.subr.bf16.mxu0 0
      %1146 = vmatpush1.bf16.msra.mxu0 0
      %1147 = vmatprep.subr.bf16.mxu0 0
      %1148 = vmatpush1.bf16.msra.mxu0 0
      %1149 = vmatprep.subr.bf16.mxu0 0
      %1150 = vmatpush1.bf16.msra.mxu0 0
      %1151 = vmatprep.subr.bf16.mxu0 0
      %1152 = vmatpush1.bf16.msra.mxu0 0
      %1153 = vmatprep.subr.bf16.mxu0 0
      %1154 = vmatpush1.bf16.msra.mxu0 0
      %1155 = vmatprep.subr.bf16.mxu0 0
      %1156 = vmatpush1.bf16.msra.mxu0 %v1129
      %1157 = vmatprep.subr.bf16.mxu0 0
      %1158 = vmatpush1.bf16.msra.mxu0 %v1128
      %1159 = vmatprep.subr.bf16.mxu0 0
      %1160 = vmatpush1.bf16.msra.mxu0 %v1127
      %1161 = vmatprep.subr.bf16.mxu0 0
      %1162 = vmatpush2.bf16.msra.mxu0 0
      %1163 = vmatprep.subr.bf16.mxu0 0
      %1164 = vmatpush2.bf16.msra.mxu0 0
      %1165 = vmatprep.subr.bf16.mxu0 0
      %1166 = vmatpush2.bf16.msra.mxu0 0
      %1167 = vmatprep.subr.bf16.mxu0 0
      %1168 = vmatpush2.bf16.msra.mxu0 0
      %1169 = vmatprep.subr.bf16.mxu0 0
      %1170 = vmatpush2.bf16.msra.mxu0 0
      %1171 = vmatprep.subr.bf16.mxu0 0
      %1172 = vmatpush2.bf16.msra.mxu0 0
      %1173 = vmatprep.subr.bf16.mxu0 0
      %1174 = vmatpush2.bf16.msra.mxu0 0
      %1175 = vmatprep.subr.bf16.mxu0 0
      %1176 = vmatpush2.bf16.msra.mxu0 0
      %1177 = vmatprep.mubr.bf16.mxu0 0
      %1178 = vmatmul.mubr.bf16.gmra.mxu0 %v1134
      %v1179 = vpop.f32.mrf.mxu0
      %v1180 = vadd.f32 %v1065, %v1179
      %v1181 = vpop.f32.mrf.mxu0
      %v1182 = vpop.f32.mrf.mxu0
      %v1183 = vadd.f32 %v1068, %v1182
      %v1184 = vpop.f32.mrf.mxu0
      %1185 = vmatprep.mubr.bf16.mxu0 0
      %1186 = vmatmul.mubr.bf16.gmra.mxu0 %v1137
      %v1187 = vpop.f32.mrf.mxu0
      %v1188 = vadd.f32 %v1073, %v1187
      %v1189 = vpop.f32.mrf.mxu0
      %v1190 = vpop.f32.mrf.mxu0
      %v1191 = vadd.f32 %v1076, %v1190
      %v1192 = vpop.f32.mrf.mxu0
      %1193 = vmatprep.mubr.bf16.mxu0 0
      %1194 = vmatmul.mubr.bf16.gmra.mxu0 %v1140
      %v1195 = vpop.f32.mrf.mxu0
      %v1196 = vadd.f32 %v1081, %v1195
      %v1197 = vpop.f32.mrf.mxu0
      %v1198 = vpop.f32.mrf.mxu0
      %v1199 = vadd.f32 %v1084, %v1198
      %v1200 = vpop.f32.mrf.mxu0
      %1201 = vmatprep.mubr.bf16.mxu0 0
      %1202 = vmatmul.mubr.bf16.gmra.mxu0 %v1143
      %v1203 = vpop.f32.mrf.mxu0
      %v1204 = vadd.f32 %v1089, %v1203
      %v1205 = vpop.f32.mrf.mxu0
      %v1206 = vpop.f32.mrf.mxu0
      %v1207 = vadd.f32 %v1092, %v1206
      %v1208 = vpop.f32.mrf.mxu0
      %1209 = vdwg.mxu0
      %s1210 = scalar_lea.vmem %s350, 16
      %v1211 = vld [vmem:[%s1210] sm:$0xf]
      %v1212 = vld [vmem:[%s1210 + $0x8] sm:$0xf]
      %v1213 = vld [vmem:[%s1210 + $0x10] sm:$0xf]
      %v1214 = vld [vmem:[%s1210 + $0x18] sm:$0xf]
      %v1215 = vld [vmem:[%s1210 + $0x20] sm:$0xf]
      %v1216 = vld [vmem:[%s1210 + $0x28] sm:$0xf]
      %1217 = vst.msk [vmem:[#allocation2] sm:$0xf] %vm404, %v1211
      %1218 = vst.msk [vmem:[#allocation2 + $0x4] sm:$0xf] %vm404, %v1212
      %1219 = vst.msk [vmem:[#allocation2 + $0x8] sm:$0xf] %vm404, %v1213
      %1220 = vst.msk [vmem:[#allocation2 + $0xc] sm:$0xf] %vm404, %v1214
      %1221 = vst.msk [vmem:[#allocation2 + $0x10] sm:$0xf] %vm404, %v1215
      %1222 = vst.msk [vmem:[#allocation2 + $0x14] sm:$0xf] %vm404, %v1216
      %v1223 = vld [vmem:[%s367] sm:$0xf]
      %s1224 = scalar_lea.vmem [#allocation2], 24
      %1225 = vst.msk [vmem:[%s1224] sm:$0xf] %vm404, %v1223
      %v1226 = vld [vmem:[%s381] sm:$0xf]
      %s1227 = scalar_lea.vmem [#allocation2], 28
      %1228 = vst.msk [vmem:[%s1227] sm:$0xf] %vm404, %v1226
      %v1229 = vld [vmem:[%s1210] sm:$0xf]
      %v1230 = vld [vmem:[%s1210 + $0x4] sm:$0x1]
      %v1231 = vld [vmem:[%s1210 + $0x8] sm:$0xf]
      %v1232 = vld [vmem:[%s1210 + $0xc] sm:$0x1]
      %v1233 = vld [vmem:[%s1210 + $0x10] sm:$0xf]
      %v1234 = vld [vmem:[%s1210 + $0x14] sm:$0x1]
      %v1235 = vld [vmem:[%s1210 + $0x18] sm:$0xf]
      %v1236 = vld [vmem:[%s1210 + $0x1c] sm:$0x1]
      %v1237 = vld [vmem:[%s1210 + $0x20] sm:$0xf]
      %v1238 = vld [vmem:[%s1210 + $0x24] sm:$0x1]
      %v1239 = vld [vmem:[%s1210 + $0x28] sm:$0xf]
      %v1240 = vld [vmem:[%s1210 + $0x2c] sm:$0x1]
      %v1242 = vshrl.u32 %v1229, 16
      %v1244 = vrot.slane %v1242, 4
      %v1245 = vshll.u32 %v1229, 16
      %v1247 = vrot.slane %v1245, 5
      %v1248 = vor.u32 %v1244, %v1247
      %v1249 = vrot.slane %v1248, 4
      %v1251 = vshll.u32 %v1230, 16
      %v1253 = vrot.slane %v1251, 5
      %v1254 = vsel %vm431, %v1249, %v1253
      %v1256 = vshrl.u32 %v1231, 16
      %v1258 = vrot.slane %v1256, 4
      %v1259 = vshll.u32 %v1231, 16
      %v1261 = vrot.slane %v1259, 5
      %v1262 = vor.u32 %v1258, %v1261
      %v1263 = vrot.slane %v1262, 4
      %v1265 = vshll.u32 %v1232, 16
      %v1267 = vrot.slane %v1265, 5
      %v1268 = vsel %vm431, %v1263, %v1267
      %v1270 = vshrl.u32 %v1233, 16
      %v1272 = vrot.slane %v1270, 4
      %v1273 = vshll.u32 %v1233, 16
      %v1275 = vrot.slane %v1273, 5
      %v1276 = vor.u32 %v1272, %v1275
      %v1277 = vrot.slane %v1276, 4
      %v1279 = vshll.u32 %v1234, 16
      %v1281 = vrot.slane %v1279, 5
      %v1282 = vsel %vm431, %v1277, %v1281
      %v1284 = vshrl.u32 %v1235, 16
      %v1286 = vrot.slane %v1284, 4
      %v1287 = vshll.u32 %v1235, 16
      %v1289 = vrot.slane %v1287, 5
      %v1290 = vor.u32 %v1286, %v1289
      %v1291 = vrot.slane %v1290, 4
      %v1293 = vshll.u32 %v1236, 16
      %v1295 = vrot.slane %v1293, 5
      %v1296 = vsel %vm431, %v1291, %v1295
      %v1298 = vshrl.u32 %v1237, 16
      %v1300 = vrot.slane %v1298, 4
      %v1301 = vshll.u32 %v1237, 16
      %v1303 = vrot.slane %v1301, 5
      %v1304 = vor.u32 %v1300, %v1303
      %v1305 = vrot.slane %v1304, 4
      %v1307 = vshll.u32 %v1238, 16
      %v1309 = vrot.slane %v1307, 5
      %v1310 = vsel %vm431, %v1305, %v1309
      %v1312 = vshrl.u32 %v1239, 16
      %v1314 = vrot.slane %v1312, 4
      %v1315 = vshll.u32 %v1239, 16
      %v1317 = vrot.slane %v1315, 5
      %v1318 = vor.u32 %v1314, %v1317
      %v1319 = vrot.slane %v1318, 4
      %v1321 = vshll.u32 %v1240, 16
      %v1323 = vrot.slane %v1321, 5
      %v1324 = vsel %vm431, %v1319, %v1323
      %1325 = vrot.lane.b32.xlu0 %v1254, 16
      %v1326 = vpop.permute.xlu0 %1325
      %1327 = vrot.lane.b32.xlu0 %v1268, 16
      %v1328 = vpop.permute.xlu0 %1327
      %1329 = vrot.lane.b32.xlu0 %v1282, 16
      %v1330 = vpop.permute.xlu0 %1329
      %1331 = vrot.lane.b32.xlu0 %v1296, 16
      %v1332 = vpop.permute.xlu0 %1331
      %1333 = vrot.lane.b32.xlu0 %v1310, 16
      %v1334 = vpop.permute.xlu0 %1333
      %1335 = vrot.lane.b32.xlu0 %v1324, 16
      %v1336 = vpop.permute.xlu0 %1335
      %1343 = vst.msk [vmem:[#allocation2] sm:$0xf] %vm568, %v1326
      %1344 = vst.msk [vmem:[#allocation2 + $0x4] sm:$0xf] %vm568, %v1328
      %1345 = vst.msk [vmem:[#allocation2 + $0x8] sm:$0xf] %vm568, %v1330
      %1346 = vst.msk [vmem:[#allocation2 + $0xc] sm:$0xf] %vm568, %v1332
      %1347 = vst.msk [vmem:[#allocation2 + $0x10] sm:$0xf] %vm568, %v1334
      %1348 = vst.msk [vmem:[#allocation2 + $0x14] sm:$0xf] %vm568, %v1336
      %v1349 = vld [vmem:[%s367] sm:$0xf]
      %v1350 = vld [vmem:[%s367 + $0x4] sm:$0x1]
      %v1352 = vshrl.u32 %v1349, 16
      %v1354 = vrot.slane %v1352, 4
      %v1355 = vshll.u32 %v1349, 16
      %v1357 = vrot.slane %v1355, 5
      %v1358 = vor.u32 %v1354, %v1357
      %v1359 = vrot.slane %v1358, 4
      %v1361 = vshll.u32 %v1350, 16
      %v1363 = vrot.slane %v1361, 5
      %v1364 = vsel %vm431, %v1359, %v1363
      %1365 = vrot.lane.b32.xlu0 %v1364, 16
      %v1366 = vpop.permute.xlu0 %1365
      %1368 = vst.msk [vmem:[%s1224] sm:$0xf] %vm568, %v1366
      %v1369 = vld [vmem:[%s381] sm:$0xf]
      %v1370 = vld [vmem:[%s381 + $0x4] sm:$0x1]
      %v1372 = vshrl.u32 %v1369, 16
      %v1374 = vrot.slane %v1372, 4
      %v1375 = vshll.u32 %v1369, 16
      %v1377 = vrot.slane %v1375, 5
      %v1378 = vor.u32 %v1374, %v1377
      %v1379 = vrot.slane %v1378, 4
      %v1381 = vshll.u32 %v1370, 16
      %v1383 = vrot.slane %v1381, 5
      %v1384 = vsel %vm431, %v1379, %v1383
      %1385 = vrot.lane.b32.xlu0 %v1384, 16
      %v1386 = vpop.permute.xlu0 %1385
      %1388 = vst.msk [vmem:[%s1227] sm:$0xf] %vm568, %v1386
      %v1389 = vld [vmem:[%s1210] sm:$0xe]
      %v1390 = vld [vmem:[%s1210 + $0x4] sm:$0x1]
      %v1391 = vld [vmem:[%s1210 + $0x8] sm:$0xe]
      %v1392 = vld [vmem:[%s1210 + $0xc] sm:$0x1]
      %v1393 = vld [vmem:[%s1210 + $0x10] sm:$0xe]
      %v1394 = vld [vmem:[%s1210 + $0x14] sm:$0x1]
      %v1395 = vld [vmem:[%s1210 + $0x18] sm:$0xe]
      %v1396 = vld [vmem:[%s1210 + $0x1c] sm:$0x1]
      %v1397 = vld [vmem:[%s1210 + $0x20] sm:$0xe]
      %v1398 = vld [vmem:[%s1210 + $0x24] sm:$0x1]
      %v1399 = vld [vmem:[%s1210 + $0x28] sm:$0xe]
      %v1400 = vld [vmem:[%s1210 + $0x2c] sm:$0x1]
      %v1413 = vrot.slane %v1389, 5
      %v1414 = vrot.slane %v1413, 4
      %v1415 = vrot.slane %v1390, 5
      %v1416 = vsel %vm611, %v1414, %v1415
      %v1417 = vrot.slane %v1391, 5
      %v1418 = vrot.slane %v1417, 4
      %v1419 = vrot.slane %v1392, 5
      %v1420 = vsel %vm611, %v1418, %v1419
      %v1421 = vrot.slane %v1393, 5
      %v1422 = vrot.slane %v1421, 4
      %v1423 = vrot.slane %v1394, 5
      %v1424 = vsel %vm611, %v1422, %v1423
      %v1425 = vrot.slane %v1395, 5
      %v1426 = vrot.slane %v1425, 4
      %v1427 = vrot.slane %v1396, 5
      %v1428 = vsel %vm611, %v1426, %v1427
      %v1429 = vrot.slane %v1397, 5
      %v1430 = vrot.slane %v1429, 4
      %v1431 = vrot.slane %v1398, 5
      %v1432 = vsel %vm611, %v1430, %v1431
      %v1433 = vrot.slane %v1399, 5
      %v1434 = vrot.slane %v1433, 4
      %v1435 = vrot.slane %v1400, 5
      %v1436 = vsel %vm611, %v1434, %v1435
      %1437 = vrot.lane.b32.xlu0 %v1416, 32
      %v1438 = vpop.permute.xlu0 %1437
      %1439 = vrot.lane.b32.xlu0 %v1420, 32
      %v1440 = vpop.permute.xlu0 %1439
      %1441 = vrot.lane.b32.xlu0 %v1424, 32
      %v1442 = vpop.permute.xlu0 %1441
      %1443 = vrot.lane.b32.xlu0 %v1428, 32
      %v1444 = vpop.permute.xlu0 %1443
      %1445 = vrot.lane.b32.xlu0 %v1432, 32
      %v1446 = vpop.permute.xlu0 %1445
      %1447 = vrot.lane.b32.xlu0 %v1436, 32
      %v1448 = vpop.permute.xlu0 %1447
      %1455 = vst.msk [vmem:[#allocation2] sm:$0xf] %vm668, %v1438
      %1456 = vst.msk [vmem:[#allocation2 + $0x4] sm:$0xf] %vm668, %v1440
      %1457 = vst.msk [vmem:[#allocation2 + $0x8] sm:$0xf] %vm668, %v1442
      %1458 = vst.msk [vmem:[#allocation2 + $0xc] sm:$0xf] %vm668, %v1444
      %1459 = vst.msk [vmem:[#allocation2 + $0x10] sm:$0xf] %vm668, %v1446
      %1460 = vst.msk [vmem:[#allocation2 + $0x14] sm:$0xf] %vm668, %v1448
      %v1461 = vld [vmem:[%s367] sm:$0xe]
      %v1462 = vld [vmem:[%s367 + $0x4] sm:$0x1]
      %v1465 = vrot.slane %v1461, 5
      %v1466 = vrot.slane %v1465, 4
      %v1467 = vrot.slane %v1462, 5
      %v1468 = vsel %vm611, %v1466, %v1467
      %1469 = vrot.lane.b32.xlu0 %v1468, 32
      %v1470 = vpop.permute.xlu0 %1469
      %1472 = vst.msk [vmem:[%s1224] sm:$0xf] %vm668, %v1470
      %v1473 = vld [vmem:[%s381] sm:$0xe]
      %v1474 = vld [vmem:[%s381 + $0x4] sm:$0x1]
      %v1477 = vrot.slane %v1473, 5
      %v1478 = vrot.slane %v1477, 4
      %v1479 = vrot.slane %v1474, 5
      %v1480 = vsel %vm611, %v1478, %v1479
      %1481 = vrot.lane.b32.xlu0 %v1480, 32
      %v1482 = vpop.permute.xlu0 %1481
      %1484 = vst.msk [vmem:[%s1227] sm:$0xf] %vm668, %v1482
      %v1485 = vld [vmem:[#allocation2] sm:$0xf]
      %v1486 = vld [vmem:[#allocation2 + $0x4] sm:$0xf]
      %v1487 = vld [vmem:[#allocation2 + $0x8] sm:$0xf]
      %v1488 = vld [vmem:[#allocation2 + $0xc] sm:$0xf]
      %v1489 = vld [vmem:[#allocation2 + $0x10] sm:$0xf]
      %v1490 = vld [vmem:[#allocation2 + $0x14] sm:$0xf]
      %v1491 = vld [vmem:[#allocation2 + $0x18] sm:$0xf]
      %v1492 = vld [vmem:[#allocation2 + $0x1c] sm:$0xf]
      %v1493 = vld [vmem:[%s3 + $0x30] sm:$0xf]
      %v1494 = vld [vmem:[%s3 + $0x34] sm:$0xf]
      %v1495 = vld [vmem:[%s3 + $0x38] sm:$0xf]
      %v1496 = vld [vmem:[%s3 + $0x3c] sm:$0xf]
      %v1497 = vld [vmem:[%s3 + $0x40] sm:$0xf]
      %v1498 = vld [vmem:[%s3 + $0x44] sm:$0xf]
      %v1507 = vunpack.c.l.b16 %v1485
      %v1508 = vunpack.c.l.b16 %v1486
      %v1509 = vunpack.c.l.b16 %v1487
      %v1510 = vunpack.c.l.b16 %v1488
      %v1511 = vunpack.c.l.b16 %v1489
      %v1512 = vunpack.c.l.b16 %v1490
      %v1513 = vunpack.c.l.b16 %v1491
      %v1514 = vunpack.c.l.b16 %v1492
      %v1515 = vpack.c.b16 %v1508, %v1507
      %v1516 = vpack.c.b16 %v1510, %v1509
      %v1517 = vpack.c.b16 %v1512, %v1511
      %v1518 = vpack.c.b16 %v1514, %v1513
      %v1525 = vunpack.c.l.b16 %v1493
      %v1526 = vunpack.c.l.b16 %v1494
      %v1527 = vunpack.c.l.b16 %v1495
      %v1528 = vunpack.c.l.b16 %v1496
      %v1529 = vunpack.c.l.b16 %v1497
      %v1530 = vunpack.c.l.b16 %v1498
      %v1531 = vpack.c.b16 %v1526, %v1525
      %v1532 = vpack.c.b16 %v1528, %v1527
      %v1533 = vpack.c.b16 %v1530, %v1529
      %v1538 = vsel %vm1017, %v1515, 0
      %v1541 = vsel %vm1017, %v1516, 0
      %v1544 = vsel %vm1017, %v1517, 0
      %v1547 = vsel %vm1017, %v1518, 0
      %1549 = vmatprep.subr.bf16.mxu0 0
      %1550 = vmatpush1.bf16.msra.mxu0 0
      %1551 = vmatprep.subr.bf16.mxu0 0
      %1552 = vmatpush1.bf16.msra.mxu0 0
      %1553 = vmatprep.subr.bf16.mxu0 0
      %1554 = vmatpush1.bf16.msra.mxu0 0
      %1555 = vmatprep.subr.bf16.mxu0 0
      %1556 = vmatpush1.bf16.msra.mxu0 0
      %1557 = vmatprep.subr.bf16.mxu0 0
      %1558 = vmatpush1.bf16.msra.mxu0 0
      %1559 = vmatprep.subr.bf16.mxu0 0
      %1560 = vmatpush1.bf16.msra.mxu0 %v1533
      %1561 = vmatprep.subr.bf16.mxu0 0
      %1562 = vmatpush1.bf16.msra.mxu0 %v1532
      %1563 = vmatprep.subr.bf16.mxu0 0
      %1564 = vmatpush1.bf16.msra.mxu0 %v1531
      %1565 = vmatprep.subr.bf16.mxu0 0
      %1566 = vmatpush2.bf16.msra.mxu0 0
      %1567 = vmatprep.subr.bf16.mxu0 0
      %1568 = vmatpush2.bf16.msra.mxu0 0
      %1569 = vmatprep.subr.bf16.mxu0 0
      %1570 = vmatpush2.bf16.msra.mxu0 0
      %1571 = vmatprep.subr.bf16.mxu0 0
      %1572 = vmatpush2.bf16.msra.mxu0 0
      %1573 = vmatprep.subr.bf16.mxu0 0
      %1574 = vmatpush2.bf16.msra.mxu0 0
      %1575 = vmatprep.subr.bf16.mxu0 0
      %1576 = vmatpush2.bf16.msra.mxu0 0
      %1577 = vmatprep.subr.bf16.mxu0 0
      %1578 = vmatpush2.bf16.msra.mxu0 0
      %1579 = vmatprep.subr.bf16.mxu0 0
      %1580 = vmatpush2.bf16.msra.mxu0 0
      %1581 = vmatprep.mubr.bf16.mxu0 0
      %1582 = vmatmul.mubr.bf16.gmra.mxu0 %v1538
      %v1583 = vpop.f32.mrf.mxu0
      %v1584 = vadd.f32 0.0, %v1583
      %v1585 = vpop.f32.mrf.mxu0
      %v1586 = vpop.f32.mrf.mxu0
      %v1587 = vadd.f32 0.0, %v1586
      %v1588 = vpop.f32.mrf.mxu0
      %1589 = vmatprep.mubr.bf16.mxu0 0
      %1590 = vmatmul.mubr.bf16.gmra.mxu0 %v1541
      %v1591 = vpop.f32.mrf.mxu0
      %v1592 = vadd.f32 0.0, %v1591
      %v1593 = vpop.f32.mrf.mxu0
      %v1594 = vpop.f32.mrf.mxu0
      %v1595 = vadd.f32 0.0, %v1594
      %v1596 = vpop.f32.mrf.mxu0
      %1597 = vmatprep.mubr.bf16.mxu0 0
      %1598 = vmatmul.mubr.bf16.gmra.mxu0 %v1544
      %v1599 = vpop.f32.mrf.mxu0
      %v1600 = vadd.f32 0.0, %v1599
      %v1601 = vpop.f32.mrf.mxu0
      %v1602 = vpop.f32.mrf.mxu0
      %v1603 = vadd.f32 0.0, %v1602
      %v1604 = vpop.f32.mrf.mxu0
      %1605 = vmatprep.mubr.bf16.mxu0 0
      %1606 = vmatmul.mubr.bf16.gmra.mxu0 %v1547
      %v1607 = vpop.f32.mrf.mxu0
      %v1608 = vadd.f32 0.0, %v1607
      %v1609 = vpop.f32.mrf.mxu0
      %v1610 = vpop.f32.mrf.mxu0
      %v1611 = vadd.f32 0.0, %v1610
      %v1612 = vpop.f32.mrf.mxu0
      %1613 = vdwg.mxu0
      %v1614 = vadd.f32 %v1180, %v1584
      %v1615 = vadd.f32 %v1183, %v1587
      %v1616 = vadd.f32 %v1188, %v1592
      %v1617 = vadd.f32 %v1191, %v1595
      %v1618 = vadd.f32 %v1196, %v1600
      %v1619 = vadd.f32 %v1199, %v1603
      %v1620 = vadd.f32 %v1204, %v1608
      %v1621 = vadd.f32 %v1207, %v1611
      %v1622 = vld [vmem:[%s4] sm:$0x1]
      %v1624 = vlaneseq
      %v1625 = vshrl.u32 %v1624, 7
      %v1626 = vsub.s32 0, %v1625
      %v1627 = vrot.slane %v1622, %v1626
      %v1629 = vadd.f32 %v1614, %v1627
      %v1630 = vadd.f32 %v1615, %v1627
      %v1631 = vadd.f32 %v1616, %v1627
      %v1632 = vadd.f32 %v1617, %v1627
      %v1633 = vadd.f32 %v1618, %v1627
      %v1634 = vadd.f32 %v1619, %v1627
      %v1635 = vadd.f32 %v1620, %v1627
      %v1636 = vadd.f32 %v1621, %v1627
      %v1637 = vpack.c.bf16 %v1629, %v1629
      %v1638 = vpack.c.bf16 %v1630, %v1630
      %v1639 = vpack.c.bf16 %v1631, %v1631
      %v1640 = vpack.c.bf16 %v1632, %v1632
      %v1641 = vpack.c.bf16 %v1633, %v1633
      %v1642 = vpack.c.bf16 %v1634, %v1634
      %v1643 = vpack.c.bf16 %v1635, %v1635
      %v1644 = vpack.c.bf16 %v1636, %v1636
      %1645 = vst [vmem:[%s393] sm:$0xf] %v1637
      %1646 = vst [vmem:[%s393 + $0x4] sm:$0xf] %v1638
      %1647 = vst [vmem:[%s393 + $0x8] sm:$0xf] %v1639
      %1648 = vst [vmem:[%s393 + $0xc] sm:$0xf] %v1640
      %1649 = vst [vmem:[%s393 + $0x10] sm:$0xf] %v1641
      %1650 = vst [vmem:[%s393 + $0x14] sm:$0xf] %v1642
      %1651 = vst [vmem:[%s393 + $0x18] sm:$0xf] %v1643
      %1652 = vst [vmem:[%s393 + $0x1c] sm:$0xf] %v1644
      %s1653 = smul.u32 8, %s21
      %p1654 = scmp.lt.s32.totalorder %s20, 1
      %s1655 = scalar_select %p1654, %s20, 1
      %p1656 = scmp.lt.s32.totalorder %s1653, 7
      %s1657 = scalar_select %p1656, %s1653, 7
      %s1658 = smul.addr %s1655, 8
      %s1659 = sadd.s32 %s1657, %s1658
      %s1660 = smul.addr %s1659, 4
      %s1661 = scalar_lea.vmem %s5, %s1660
      // Predicated region
      $region41: #{spdconv_oct_forward.1} parent=39 // pred_check
        %p1662 = pneg %p184
      $region42: #{spdconv_oct_forward.1} parent=39 // pred_check_branch
        %1664 = sbr.rel (%p1662) target = $region44
      $region43: #{spdconv_oct_forward.1} parent=39 // pred_region
        %s1665 = smul.u32 8, %s21
      $region44: #{spdconv_oct_forward.1} parent=39 // pred_fallthru
        _
    $region40: #{spdconv_oct_forward.1} parent=5 // pred_fallthru
      _
    %p1666 = scmp.le.s32.totalorder 2, %s11
    // Predicated region
    $region45: #{spdconv_oct_forward.1} parent=5 // pred_check
      %p1667 = pneg %p1666
    $region46: #{spdconv_oct_forward.1} parent=5 // pred_check_branch
      %1669 = sbr.rel (%p1667) target = $region48
    $region47: #{spdconv_oct_forward.1} parent=5 // pred_region
      %s1670 = ssub.s32 %s11, 2
      // Predicated region
      $region49: #{spdconv_oct_forward.1} parent=47 // pred_check
        %p1671 = pneg %p190
      $region50: #{spdconv_oct_forward.1} parent=47 // pred_check_branch
        %1673 = sbr.rel (%p1671) target = $region52
      $region51: #{spdconv_oct_forward.1} parent=47 // pred_region
        %s1674 = smul.u32 8, %s23
        %p1675 = scmp.lt.s32.totalorder %s22, 1
        %s1676 = scalar_select %p1675, %s22, 1
        %p1677 = scmp.lt.s32.totalorder %s1674, 7
        %s1678 = scalar_select %p1677, %s1674, 7
        %s1679 = smul.addr %s1676, 8
        %s1680 = sadd.s32 %s1678, %s1679
        %s1681 = smul.addr %s1680, 4
        %s1682 = scalar_lea.vmem %s5, %s1681
      $region52: #{spdconv_oct_forward.1} parent=47 // pred_fallthru
        _
    $region48: #{spdconv_oct_forward.1} parent=5 // pred_fallthru
      _
  $region6: #{spdconv_oct_forward.1} parent=0 // loop_footer
    %s15 = sadd.s32 1, %s11
  $region7: #{spdconv_oct_forward.1} parent=0 // loop_footer_branch
    %10 = sbr.rel target = $region3
  $region8: #{spdconv_oct_forward.1} parent=0 // loop_exit
    _

</llo_original>
